<compile_context>
chip_gen: v7x
topology: tpu7x:2x2x1
jax: 0.10.0
libtpu: 0.0.40
codegen_flags: <defaults>
</compile_context>

<pallas_src>
import functools

import jax
import jax.numpy as jnp
from jax.experimental import pallas as pl
from jax.experimental.pallas import tpu as pltpu


def _round_up(x, m):
    return (x + m - 1) // m * m


def visual_attention_kernel(img_ref, h_ref, w_img_ref, w_lang_ref, w_att_ref,
                            out_ref, *, mm_dtype, regions_padded, chunk_rows):
    # Per-grid-step refs (TB batch rows per step):
    #   img_ref   : (TB, R, J)  image features, storage dtype (full R extent)
    #   h_ref     : (TB, L)     language encodings, storage dtype
    #   w_img_ref : (J, H)      matmul dtype
    #   w_lang_ref: (L, H)      matmul dtype
    #   w_att_ref : (1, H)      f32 attention weight row
    #   out_ref   : (TB, J)
    TB, R, J = img_ref.shape
    H = w_img_ref.shape[1]
    Rp = regions_padded

    # ---- image projection: one (TB*Rp, J) @ (J, H) MXU matmul per step ----
    img = img_ref[...]                                        # (TB, R, J)
    if Rp != R:
        # Pad the region axis in VMEM only (never in HBM) so the reshape below
        # stays tile-aligned.  Padded regions are masked out of the softmax.
        img = jnp.concatenate(
            [img, jnp.zeros((TB, Rp - R, J), img.dtype)], axis=1)
    x2d = img.reshape(TB * Rp, J)
    if mm_dtype is not None:
        x2d = x2d.astype(mm_dtype)        # cast AFTER the DMA: MXU operand only
    img_emb = jnp.dot(x2d, w_img_ref[...],
                      preferred_element_type=jnp.float32)     # (TB*Rp, H) f32
    img_emb = img_emb.reshape(TB, Rp, H)

    # ---- language projection, batched over the TB rows of this step ----
    h = h_ref[...]
    if mm_dtype is not None:
        h = h.astype(mm_dtype)
    lang_emb = jnp.dot(h, w_lang_ref[...],
                       preferred_element_type=jnp.float32)    # (TB, H) f32

    # tanh / softmax / weighted sum stay f32 (v5e has no bf16 VPU/EUP).
    act = jnp.tanh(img_emb + lang_emb[:, None, :])            # (TB, Rp, H)

    # ---- attention logits: VPU multiply + lane reduction over H ----
    # TODO(synk): at production H (>= 256) reshape act to (TB*Rp, H) and use a
    # (TB*Rp, H) @ (H, 1) MXU dot (f32 accumulation) so the H-reduction
    # overlaps the EUP tanh instead of burning VPU/XLU slots; at demo H=64 the
    # VPU path is the right choice.
    # The linear_attention bias is intentionally omitted: softmax(x + c) ==
    # softmax(x), so the module output is independent of it.
    w_row = w_att_ref[...].astype(jnp.float32)                # (1, H)
    logits = jnp.sum(act * w_row[None, :, :], axis=-1)        # (TB, Rp)
    if Rp != R:
        r_ids = jax.lax.broadcasted_iota(jnp.int32, (TB, Rp), 1)
        logits = jnp.where(r_ids < R, logits, -1e30)

    # ---- softmax over the region axis (dim=1 of the PyTorch module) ----
    m = jnp.max(logits, axis=-1, keepdims=True)
    e = jnp.exp(logits - m)
    attn = e * pl.reciprocal(jnp.sum(e, axis=-1, keepdims=True), approx=False)

    # ---- attention-weighted sum of the ORIGINAL image features ----
    # Fused, chunked accumulation: never materializes a (TB, Rp, J) f32
    # temporary (would not fit v7x VMEM at production R / J / TB).  Chunks are
    # re-read from the VMEM input block (vector loads, no extra HBM traffic).
    acc = jnp.zeros((TB, J), jnp.float32)
    for start in range(0, R, chunk_rows):
        size = min(chunk_rows, R - start)
        a = attn[:, start:start + size]                               # (TB, s)
        chunk = img_ref[:, start:start + size, :].astype(jnp.float32)  # (TB, s, J)
        acc = acc + jnp.sum(a[:, :, None] * chunk, axis=1)
    out_ref[...] = acc.astype(out_ref.dtype)


def _vmem_capacity_bytes():
    # Conservative default = v7x per-core VMEM if the query is unavailable.
    try:
        return int(pltpu.get_tpu_info().vmem_capacity_bytes)
    except Exception:
        return 64 * 1024 * 1024


def visual_attention(images_embedded, h_lang_enc, w_img, w_lang, w_att,
                     b_att=None, *, block_b=128, matmul_dtype=None,
                     out_dtype=jnp.float32, vmem_budget_bytes=None,
                     single_buffer_weights=True):
    """Forward pass of VisualAttention.

    images_embedded: (B, R, J); h_lang_enc: (B, L); w_img: (J, H);
    w_lang: (L, H); w_att: (H, 1); b_att: accepted but unused — the bias of
    linear_attention cancels exactly in the softmax.  Returns (B, J) in
    `out_dtype`.

    matmul_dtype: optional dtype (jnp.bfloat16 recommended on v5e/v6e/v7x) for
    the MXU operands only; the cast happens in-kernel after the DMA so it adds
    no HBM traffic.  Accumulation and all elementwise math stay f32.  For the
    full HBM saving, store/pass the images tensor in bf16 directly.
    """
    del b_att  # cancels in softmax; kept in the signature for drop-in parity.

    B, R, J = images_embedded.shape
    L = h_lang_enc.shape[1]
    H = w_img.shape[1]

    if matmul_dtype is not None:
        # Weights are tiny and reused by every grid step: cast them once here.
        # The big (B, R, J) tensor is cast inside the kernel (no HBM pass).
        w_img = w_img.astype(matmul_dtype)
        w_lang = w_lang.astype(matmul_dtype)
    w_att_row = w_att.reshape(1, H).astype(jnp.float32)

    in_isz = jnp.dtype(images_embedded.dtype).itemsize
    h_isz = jnp.dtype(h_lang_enc.dtype).itemsize
    w_isz = jnp.dtype(w_img.dtype).itemsize
    out_isz = jnp.dtype(out_dtype).itemsize
    mm_isz = (jnp.dtype(matmul_dtype).itemsize
              if matmul_dtype is not None else in_isz)

    # TB is the second-to-last dim of the (TB, L) and (TB, J) blocks (their
    # last dims are full-extent, hence exempt), so it must be a multiple of
    # the sublane tile of those dtypes.
    sub = 8 * max(max(1, 4 // h_isz), max(1, 4 // out_isz))
    # Region-axis padding (VMEM only) so the in-kernel reshape is tile-aligned.
    sub_r = 8 * max(1, 4 // in_isz)
    Rp = _round_up(R, sub_r)
    chunk_rows = min(8, R)

    # ---- TB from an explicit VMEM budget (v7x: 64 MiB/core) ----
    capacity = _vmem_capacity_bytes()
    budget = (int(vmem_budget_bytes) if vmem_budget_bytes is not None
              else max(24 << 20, capacity // 2))
    weights_bytes = 2 * ((J * H + L * H) * w_isz + H * 4)   # assume double-buffered
    per_row = (2 * R * J * in_isz             # images block (double-buffered)
               + Rp * J * mm_isz              # cast/reshaped MXU operand
               + 2 * Rp * H * 4               # img_emb + act (f32)
               + 2 * L * h_isz + H * 4        # h block (double-buffered) + lang_emb
               + 6 * Rp * 4                   # logits / mask / softmax temps
               + chunk_rows * J * 4           # weighted-sum chunk temp
               + J * 4 + 2 * J * out_isz)     # accumulator + output block
    vmem_cap_tb = max(sub,
                      (max(budget - weights_bytes, 0) // per_row) // sub * sub)

    Bp = _round_up(B, sub)                    # batch pad <= one sublane tile
    cap = max(sub, min(max(sub, (block_b // sub) * sub), vmem_cap_tb, Bp))
    if Bp >= 2 * sub:
        # Keep >= 2 grid steps so both v7x TensorCores get work (free on
        # single-TC v5e/v6e).
        cap = min(cap, max(sub, (Bp // 2) // sub * sub))
    TB = sub
    t = cap
    while t >= sub:
        if Bp % t == 0:
            TB = t
            break
        t -= sub

    if Bp != B:
        # TODO(synk): handle the ragged batch tail fully in-kernel (masked
        # writes) to avoid even this <= (sub-1)-row pad copy at huge B.
        images_embedded = jnp.pad(images_embedded,
                                  ((0, Bp - B), (0, 0), (0, 0)))
        h_lang_enc = jnp.pad(h_lang_enc, ((0, Bp - B), (0, 0)))

    est = weights_bytes + TB * per_row
    vmem_limit = int(min(capacity - (2 << 20), max(est + (8 << 20), 32 << 20)))

    kernel = functools.partial(visual_attention_kernel,
                               mm_dtype=matmul_dtype, regions_padded=Rp,
                               chunk_rows=chunk_rows)

    def call(weight_buffer_count):
        if weight_buffer_count == 1:
            wspec = lambda shape: pl.BlockSpec(shape, lambda b: (0, 0),
                                               pipeline_mode=pl.Buffered(1))
        else:
            wspec = lambda shape: pl.BlockSpec(shape, lambda b: (0, 0))
        grid_spec = pltpu.PrefetchScalarGridSpec(
            num_scalar_prefetch=0,
            grid=(Bp // TB,),
            in_specs=[
                # Dominant DMA.  TODO(synk): sweep pipeline_mode=pl.Buffered(3)
                # here if the per-step DMA is exposed (re-check the VMEM
                # budget first, especially on v7x).
                pl.BlockSpec((TB, R, J), lambda b: (b, 0, 0)),   # images
                pl.BlockSpec((TB, L), lambda b: (b, 0)),         # h_lang_enc
                wspec((J, H)),                                   # W_img (in,out)
                wspec((L, H)),                                   # W_lang (in,out)
                wspec((1, H)),                                   # w_att row
            ],
            out_specs=pl.BlockSpec((TB, J), lambda b: (b, 0)),
        )
        return pl.pallas_call(
            kernel,
            out_shape=jax.ShapeDtypeStruct((Bp, J), out_dtype),
            grid_spec=grid_spec,
            compiler_params=pltpu.CompilerParams(
                dimension_semantics=("parallel",),
                vmem_limit_bytes=vmem_limit),
        )(images_embedded, h_lang_enc, w_img, w_lang, w_att_row)

    if single_buffer_weights:
        try:
            out = call(1)
        except Exception:
            # pl.Buffered(1) unsupported by this Pallas version: fall back to
            # default double-buffered weights (costs one extra weight copy).
            out = call(2)
    else:
        out = call(2)

    return out[:B]


def visual_attention_ref(images_embedded, h_lang_enc, w_img, w_lang, w_att, b_att):
    # Pure-JAX reference, mirrors the PyTorch forward exactly (incl. bias).
    img_emb = images_embedded @ w_img                    # (B, R, H)
    lang_emb = (h_lang_enc @ w_lang)[:, None, :]         # (B, 1, H)
    act = jnp.tanh(img_emb + lang_emb)                   # (B, R, H)
    logits = act @ w_att + b_att                         # (B, R, 1)
    attn = jax.nn.softmax(logits, axis=1)                # (B, R, 1)
    return jnp.sum(attn * images_embedded, axis=1)       # (B, J)


def visual_attention_mixed_ref(images_embedded, h_lang_enc, w_img, w_lang,
                               w_att, mm_dtype):
    # Reference for the mixed-precision path: MXU operands in mm_dtype,
    # accumulation / tanh / softmax / weighted sum in f32 (bias cancels).
    c = lambda x: x.astype(mm_dtype)
    img_emb = jnp.einsum("brj,jh->brh", c(images_embedded), c(w_img),
                         preferred_element_type=jnp.float32)
    lang_emb = jnp.dot(c(h_lang_enc), c(w_lang),
                       preferred_element_type=jnp.float32)[:, None, :]
    act = jnp.tanh(img_emb + lang_emb)
    logits = jnp.sum(act * w_att[:, 0].astype(jnp.float32)[None, None, :], axis=-1)
    attn = jax.nn.softmax(logits, axis=-1)[:, :, None]
    return jnp.sum(attn * images_embedded.astype(jnp.float32), axis=1)


if __name__ == "__main__":
    # Small, TPU-friendly shapes consistent with the module's forward.
    B = 16         # batch
    R = 8          # number of image regions (softmax axis)
    J = 128        # joint_embed_size (multiple of 128 -> lane-dense output)
    L = 32         # language_encoding_lstm_size
    H = 64         # hidden_size

    key = jax.random.PRNGKey(0)
    k1, k2, k3, k4, k5, k6 = jax.random.split(key, 6)
    images_embedded = jax.random.normal(k1, (B, R, J), dtype=jnp.float32)
    h_lang_enc = jax.random.normal(k2, (B, L), dtype=jnp.float32)
    w_img = jax.random.normal(k3, (J, H), dtype=jnp.float32) * 0.1
    w_lang = jax.random.normal(k4, (L, H), dtype=jnp.float32) * 0.1
    w_att = jax.random.normal(k5, (H, 1), dtype=jnp.float32) * 0.1
    b_att = jax.random.normal(k6, (1,), dtype=jnp.float32) * 0.1

    ref = visual_attention_ref(images_embedded, h_lang_enc, w_img, w_lang,
                               w_att, b_att)

    # 1) Full-f32 path; TB=8 -> grid=(2,): exact check vs. the reference.
    out_f32 = jax.block_until_ready(
        visual_attention(images_embedded, h_lang_enc, w_img, w_lang, w_att,
                         b_att))
    assert out_f32.shape == (B, J) and out_f32.dtype == jnp.float32
    assert jnp.allclose(out_f32, ref, atol=1e-5, rtol=1e-5), "f32 mismatch"

    # 2) bf16 MXU-operand path (cast happens in-kernel after the DMA; the
    #    weighted sum still uses the full-precision image features).
    out_mm = jax.block_until_ready(
        visual_attention(images_embedded, h_lang_enc, w_img, w_lang, w_att,
                         b_att, matmul_dtype=jnp.bfloat16))
    ref_mm = visual_attention_mixed_ref(images_embedded, h_lang_enc, w_img,
                                        w_lang, w_att, jnp.bfloat16)
    assert jnp.allclose(out_mm, ref_mm, atol=1e-2, rtol=1e-2), "bf16-mm mismatch"

    # 3) bf16 output (halves writeback traffic); accumulator stays f32.
    out_lp = jax.block_until_ready(
        visual_attention(images_embedded, h_lang_enc, w_img, w_lang, w_att,
                         b_att, out_dtype=jnp.bfloat16))
    assert out_lp.dtype == jnp.bfloat16
    assert jnp.allclose(out_lp.astype(jnp.float32), ref,
                        atol=2e-2, rtol=2e-2), "bf16-out mismatch"

    print("KERNEL_OK")
</pallas_src>

<mosaic_0001>
module attributes {stable_mosaic.version = 11 : i64} {
  func.func @visual_attention_kernel(%arg0: i32, %arg1: memref<8x8x128xf32, #tpu.memory_space<vmem>>, %arg2: memref<8x32xf32, #tpu.memory_space<vmem>>, %arg3: memref<128x64xf32, #tpu.memory_space<vmem>>, %arg4: memref<32x64xf32, #tpu.memory_space<vmem>>, %arg5: memref<1x64xf32, #tpu.memory_space<vmem>>, %arg6: memref<8x128xf32, #tpu.memory_space<vmem>>) attributes {dimension_semantics = [#tpu.dimension_semantics<parallel>], iteration_bounds = array<i64: 2>, scalar_prefetch = 0 : i64, scratch_operands = 0 : i64, tpu.core_type = #tpu.core_type<tc>, window_params = [{transform_indices = @transform_0, window_bounds = array<i64: 8, 8, 128>}, {transform_indices = @transform_1, window_bounds = array<i64: 8, 32>}, {pipeline_mode = #tpu.pipeline_mode<synchronous>, transform_indices = @transform_2, window_bounds = array<i64: 128, 64>}, {pipeline_mode = #tpu.pipeline_mode<synchronous>, transform_indices = @transform_3, window_bounds = array<i64: 32, 64>}, {pipeline_mode = #tpu.pipeline_mode<synchronous>, transform_indices = @transform_4, window_bounds = array<i64: 1, 64>}, {transform_indices = @transform_5, window_bounds = array<i64: 8, 128>}]} {
    %c0 = arith.constant 0 : index
    %c0_0 = arith.constant 0 : index
    %c0_1 = arith.constant 0 : index
    %0 = vector.load %arg1[%c0, %c0_0, %c0_1] : memref<8x8x128xf32, #tpu.memory_space<vmem>>, vector<8x8x128xf32>
    %1 = vector.shape_cast %0 : vector<8x8x128xf32> to vector<64x128xf32>
    %c0_2 = arith.constant 0 : index
    %c0_3 = arith.constant 0 : index
    %2 = vector.load %arg3[%c0_2, %c0_3] : memref<128x64xf32, #tpu.memory_space<vmem>>, vector<128x64xf32>
    %cst = arith.constant dense<0.000000e+00> : vector<64x64xf32>
    %3 = tpu.matmul %1, %2, %cst {dimension_numbers = #tpu.dot_dimension_numbers<[1], [0], [0], [1], [0, 0, 1, 1], [], []>} : vector<64x128xf32>, vector<128x64xf32>, vector<64x64xf32> -> vector<64x64xf32>
    %4 = vector.shape_cast %3 : vector<64x64xf32> to vector<8x8x64xf32>
    %c0_4 = arith.constant 0 : index
    %c0_5 = arith.constant 0 : index
    %5 = vector.load %arg2[%c0_4, %c0_5] : memref<8x32xf32, #tpu.memory_space<vmem>>, vector<8x32xf32>
    %c0_6 = arith.constant 0 : index
    %c0_7 = arith.constant 0 : index
    %6 = vector.load %arg4[%c0_6, %c0_7] : memref<32x64xf32, #tpu.memory_space<vmem>>, vector<32x64xf32>
    %cst_8 = arith.constant dense<0.000000e+00> : vector<8x64xf32>
    %7 = tpu.matmul %5, %6, %cst_8 {dimension_numbers = #tpu.dot_dimension_numbers<[1], [0], [0], [1], [0, 0, 1, 1], [], []>} : vector<8x32xf32>, vector<32x64xf32>, vector<8x64xf32> -> vector<8x64xf32>
    %8 = vector.shape_cast %7 : vector<8x64xf32> to vector<8x1x64xf32>
    %9 = vector.broadcast %8 : vector<8x1x64xf32> to vector<8x8x64xf32>
    %10 = arith.addf %4, %9 : vector<8x8x64xf32>
    %11 = math.tanh %10 : vector<8x8x64xf32>
    %c0_9 = arith.constant 0 : index
    %c0_10 = arith.constant 0 : index
    %12 = vector.load %arg5[%c0_9, %c0_10] : memref<1x64xf32, #tpu.memory_space<vmem>>, vector<1x64xf32>
    %13 = vector.shape_cast %12 : vector<1x64xf32> to vector<1x1x64xf32>
    %14 = vector.broadcast %13 : vector<1x1x64xf32> to vector<8x8x64xf32>
    %15 = arith.mulf %11, %14 : vector<8x8x64xf32>
    %cst_11 = arith.constant dense<0.000000e+00> : vector<8x8xf32>
    %16 = vector.multi_reduction <add>, %15, %cst_11 [2] : vector<8x8x64xf32> to vector<8x8xf32>
    %cst_12 = arith.constant dense<0xFF800000> : vector<8xf32>
    %17 = vector.multi_reduction <maximumf>, %16, %cst_12 [1] : vector<8x8xf32> to vector<8xf32>
    %18 = vector.shape_cast %17 : vector<8xf32> to vector<8x1xf32>
    %19 = vector.broadcast %18 : vector<8x1xf32> to vector<8x8xf32>
    %20 = arith.subf %16, %19 : vector<8x8xf32>
    %21 = math.exp %20 : vector<8x8xf32>
    %cst_13 = arith.constant dense<0.000000e+00> : vector<8xf32>
    %22 = vector.multi_reduction <add>, %21, %cst_13 [1] : vector<8x8xf32> to vector<8xf32>
    %23 = vector.shape_cast %22 : vector<8xf32> to vector<8x1xf32>
    %24 = tpu.reciprocal %23 : vector<8x1xf32> -> vector<8x1xf32>
    %25 = vector.broadcast %24 : vector<8x1xf32> to vector<8x8xf32>
    %26 = arith.mulf %21, %25 : vector<8x8xf32>
    %cst_14 = arith.constant 0.000000e+00 : f32
    %27 = vector.broadcast %cst_14 : f32 to vector<8x128xf32>
    %c0_15 = arith.constant 0 : index
    %c0_16 = arith.constant 0 : index
    %c0_17 = arith.constant 0 : index
    %28 = vector.load %arg1[%c0_15, %c0_16, %c0_17] : memref<8x8x128xf32, #tpu.memory_space<vmem>>, vector<8x8x128xf32>
    %29 = vector.shape_cast %26 : vector<8x8xf32> to vector<8x8x1xf32>
    %30 = vector.broadcast %29 : vector<8x8x1xf32> to vector<8x8x128xf32>
    %31 = arith.mulf %30, %28 : vector<8x8x128xf32>
    %cst_18 = arith.constant dense<0.000000e+00> : vector<8x128xf32>
    %32 = vector.multi_reduction <add>, %31, %cst_18 [1] : vector<8x8x128xf32> to vector<8x128xf32>
    %33 = arith.addf %27, %32 : vector<8x128xf32>
    %c0_19 = arith.constant 0 : index
    %c0_20 = arith.constant 0 : index
    %34 = vector.load %arg6[%c0_19, %c0_20] : memref<8x128xf32, #tpu.memory_space<vmem>>, vector<8x128xf32>
    tpu.vector_store %arg6[%c0_19, %c0_20], %33 {strides = array<i32>} : memref<8x128xf32, #tpu.memory_space<vmem>>, vector<8x128xf32>,
    return
  }
  func.func @transform_0(%arg0: i32) -> (i32, i32, i32) {
    %c0_i32 = arith.constant 0 : i32
    %c0_i32_0 = arith.constant 0 : i32
    %c0_i32_1 = arith.constant 0 : i32
    return %arg0, %c0_i32, %c0_i32_0 : i32, i32, i32
  }
  func.func @transform_1(%arg0: i32) -> (i32, i32) {
    %c0_i32 = arith.constant 0 : i32
    %c0_i32_0 = arith.constant 0 : i32
    return %arg0, %c0_i32 : i32, i32
  }
  func.func @transform_2(%arg0: i32) -> (i32, i32) {
    %c0_i32 = arith.constant 0 : i32
    %c0_i32_0 = arith.constant 0 : i32
    %c0_i32_1 = arith.constant 0 : i32
    return %c0_i32, %c0_i32_0 : i32, i32
  }
  func.func @transform_3(%arg0: i32) -> (i32, i32) {
    %c0_i32 = arith.constant 0 : i32
    %c0_i32_0 = arith.constant 0 : i32
    %c0_i32_1 = arith.constant 0 : i32
    return %c0_i32, %c0_i32_0 : i32, i32
  }
  func.func @transform_4(%arg0: i32) -> (i32, i32) {
    %c0_i32 = arith.constant 0 : i32
    %c0_i32_0 = arith.constant 0 : i32
    %c0_i32_1 = arith.constant 0 : i32
    return %c0_i32, %c0_i32_0 : i32, i32
  }
  func.func @transform_5(%arg0: i32) -> (i32, i32) {
    %c0_i32 = arith.constant 0 : i32
    %c0_i32_0 = arith.constant 0 : i32
    return %arg0, %c0_i32 : i32, i32
  }
}

module attributes {stable_mosaic.version = 11 : i64} {
  func.func @visual_attention_kernel(%arg0: i32, %arg1: memref<8x8x128xf32, #tpu.memory_space<vmem>>, %arg2: memref<8x32xf32, #tpu.memory_space<vmem>>, %arg3: memref<128x64xf32, #tpu.memory_space<vmem>>, %arg4: memref<32x64xf32, #tpu.memory_space<vmem>>, %arg5: memref<1x64xf32, #tpu.memory_space<vmem>>, %arg6: memref<8x128xf32, #tpu.memory_space<vmem>>) attributes {dimension_semantics = [#tpu.dimension_semantics<parallel>], iteration_bounds = array<i64: 2>, scalar_prefetch = 0 : i64, scratch_operands = 0 : i64, tpu.core_type = #tpu.core_type<tc>, window_params = [{transform_indices = @transform_0, window_bounds = array<i64: 8, 8, 128>}, {transform_indices = @transform_1, window_bounds = array<i64: 8, 32>}, {pipeline_mode = #tpu.pipeline_mode<synchronous>, transform_indices = @transform_2, window_bounds = array<i64: 128, 64>}, {pipeline_mode = #tpu.pipeline_mode<synchronous>, transform_indices = @transform_3, window_bounds = array<i64: 32, 64>}, {pipeline_mode = #tpu.pipeline_mode<synchronous>, transform_indices = @transform_4, window_bounds = array<i64: 1, 64>}, {transform_indices = @transform_5, window_bounds = array<i64: 8, 128>}]} {
    %c0 = arith.constant 0 : index
    %c0_0 = arith.constant 0 : index
    %c0_1 = arith.constant 0 : index
    %0 = vector.load %arg1[%c0, %c0_0, %c0_1] : memref<8x8x128xf32, #tpu.memory_space<vmem>>, vector<8x8x128xf32>
    %1 = vector.shape_cast %0 : vector<8x8x128xf32> to vector<64x128xf32>
    %c0_2 = arith.constant 0 : index
    %c0_3 = arith.constant 0 : index
    %2 = vector.load %arg3[%c0_2, %c0_3] : memref<128x64xf32, #tpu.memory_space<vmem>>, vector<128x64xf32>
    %cst = arith.constant dense<0.000000e+00> : vector<64x64xf32>
    %3 = tpu.matmul %1, %2, %cst {dimension_numbers = #tpu.dot_dimension_numbers<[1], [0], [0], [1], [0, 0, 1, 1], [], []>} : vector<64x128xf32>, vector<128x64xf32>, vector<64x64xf32> -> vector<64x64xf32>
    %4 = vector.shape_cast %3 : vector<64x64xf32> to vector<8x8x64xf32>
    %c0_4 = arith.constant 0 : index
    %c0_5 = arith.constant 0 : index
    %5 = vector.load %arg2[%c0_4, %c0_5] : memref<8x32xf32, #tpu.memory_space<vmem>>, vector<8x32xf32>
    %c0_6 = arith.constant 0 : index
    %c0_7 = arith.constant 0 : index
    %6 = vector.load %arg4[%c0_6, %c0_7] : memref<32x64xf32, #tpu.memory_space<vmem>>, vector<32x64xf32>
    %cst_8 = arith.constant dense<0.000000e+00> : vector<8x64xf32>
    %7 = tpu.matmul %5, %6, %cst_8 {dimension_numbers = #tpu.dot_dimension_numbers<[1], [0], [0], [1], [0, 0, 1, 1], [], []>} : vector<8x32xf32>, vector<32x64xf32>, vector<8x64xf32> -> vector<8x64xf32>
    %8 = vector.shape_cast %7 : vector<8x64xf32> to vector<8x1x64xf32>
    %9 = vector.broadcast %8 : vector<8x1x64xf32> to vector<8x8x64xf32>
    %10 = arith.addf %4, %9 : vector<8x8x64xf32>
    %11 = math.tanh %10 : vector<8x8x64xf32>
    %c0_9 = arith.constant 0 : index
    %c0_10 = arith.constant 0 : index
    %12 = vector.load %arg5[%c0_9, %c0_10] : memref<1x64xf32, #tpu.memory_space<vmem>>, vector<1x64xf32>
    %13 = vector.shape_cast %12 : vector<1x64xf32> to vector<1x1x64xf32>
    %14 = vector.broadcast %13 : vector<1x1x64xf32> to vector<8x8x64xf32>
    %15 = arith.mulf %11, %14 : vector<8x8x64xf32>
    %cst_11 = arith.constant dense<0.000000e+00> : vector<8x8xf32>
    %16 = vector.multi_reduction <add>, %15, %cst_11 [2] : vector<8x8x64xf32> to vector<8x8xf32>
    %cst_12 = arith.constant dense<0xFF800000> : vector<8xf32>
    %17 = vector.multi_reduction <maximumf>, %16, %cst_12 [1] : vector<8x8xf32> to vector<8xf32>
    %18 = vector.shape_cast %17 : vector<8xf32> to vector<8x1xf32>
    %19 = vector.broadcast %18 : vector<8x1xf32> to vector<8x8xf32>
    %20 = arith.subf %16, %19 : vector<8x8xf32>
    %21 = math.exp %20 : vector<8x8xf32>
    %cst_13 = arith.constant dense<0.000000e+00> : vector<8xf32>
    %22 = vector.multi_reduction <add>, %21, %cst_13 [1] : vector<8x8xf32> to vector<8xf32>
    %23 = vector.shape_cast %22 : vector<8xf32> to vector<8x1xf32>
    %24 = tpu.reciprocal %23 : vector<8x1xf32> -> vector<8x1xf32>
    %25 = vector.broadcast %24 : vector<8x1xf32> to vector<8x8xf32>
    %26 = arith.mulf %21, %25 : vector<8x8xf32>
    %cst_14 = arith.constant 0.000000e+00 : f32
    %27 = vector.broadcast %cst_14 : f32 to vector<8x128xf32>
    %c0_15 = arith.constant 0 : index
    %c0_16 = arith.constant 0 : index
    %c0_17 = arith.constant 0 : index
    %28 = vector.load %arg1[%c0_15, %c0_16, %c0_17] : memref<8x8x128xf32, #tpu.memory_space<vmem>>, vector<8x8x128xf32>
    %29 = vector.shape_cast %26 : vector<8x8xf32> to vector<8x8x1xf32>
    %30 = vector.broadcast %29 : vector<8x8x1xf32> to vector<8x8x128xf32>
    %31 = arith.mulf %30, %28 : vector<8x8x128xf32>
    %cst_18 = arith.constant dense<0.000000e+00> : vector<8x128xf32>
    %32 = vector.multi_reduction <add>, %31, %cst_18 [1] : vector<8x8x128xf32> to vector<8x128xf32>
    %33 = arith.addf %27, %32 : vector<8x128xf32>
    %c0_19 = arith.constant 0 : index
    %c0_20 = arith.constant 0 : index
    %34 = vector.load %arg6[%c0_19, %c0_20] : memref<8x128xf32, #tpu.memory_space<vmem>>, vector<8x128xf32>
    tpu.vector_store %arg6[%c0_19, %c0_20], %33 {strides = array<i32>} : memref<8x128xf32, #tpu.memory_space<vmem>>, vector<8x128xf32>,
    return
  }
  func.func @transform_0(%arg0: i32) -> (i32, i32, i32) {
    %c0_i32 = arith.constant 0 : i32
    %c0_i32_0 = arith.constant 0 : i32
    %c0_i32_1 = arith.constant 0 : i32
    return %arg0, %c0_i32, %c0_i32_0 : i32, i32, i32
  }
  func.func @transform_1(%arg0: i32) -> (i32, i32) {
    %c0_i32 = arith.constant 0 : i32
    %c0_i32_0 = arith.constant 0 : i32
    return %arg0, %c0_i32 : i32, i32
  }
  func.func @transform_2(%arg0: i32) -> (i32, i32) {
    %c0_i32 = arith.constant 0 : i32
    %c0_i32_0 = arith.constant 0 : i32
    %c0_i32_1 = arith.constant 0 : i32
    return %c0_i32, %c0_i32_0 : i32, i32
  }
  func.func @transform_3(%arg0: i32) -> (i32, i32) {
    %c0_i32 = arith.constant 0 : i32
    %c0_i32_0 = arith.constant 0 : i32
    %c0_i32_1 = arith.constant 0 : i32
    return %c0_i32, %c0_i32_0 : i32, i32
  }
  func.func @transform_4(%arg0: i32) -> (i32, i32) {
    %c0_i32 = arith.constant 0 : i32
    %c0_i32_0 = arith.constant 0 : i32
    %c0_i32_1 = arith.constant 0 : i32
    return %c0_i32, %c0_i32_0 : i32, i32
  }
  func.func @transform_5(%arg0: i32) -> (i32, i32) {
    %c0_i32 = arith.constant 0 : i32
    %c0_i32_0 = arith.constant 0 : i32
    return %arg0, %c0_i32 : i32, i32
  }
}

</mosaic_0001>

<llo_original>
// kernel: tpu_custom_call.1
$region0: #{tpu_custom_call.1}
  #allocation0 [shape = 'u32[]', space=smem, size = 0x4, offset = 0x4, fixed_abs, tag = 'smem constant byte address 0x4 - core index']
  #allocation1 [shape = 'u32[144,128]{1,0:T(1,128)}', space=vmem, size = 0x12000, scoped, tag = 'internal scratch']
  %s0 = inlined_call_operand.vmem [shape: f32[16,8,128], index: 0, kind: input, shape index: {}]
  %s1 = inlined_call_operand.vmem [shape: f32[16,32], index: 1, kind: input, shape index: {}]
  %s2 = inlined_call_operand.vmem [shape: f32[128,64], index: 2, kind: input, shape index: {}]
  %s3 = inlined_call_operand.vmem [shape: f32[32,64], index: 3, kind: input, shape index: {}]
  %s4 = inlined_call_operand.vmem [shape: f32[1,64], index: 4, kind: input, shape index: {}]
  %s5 = inlined_call_operand.hbm [shape: f32[16,128], index: 5, kind: output, shape index: {}]
  %s6 = sld [smem:[#allocation0]]
  $region53: #{tpu_custom_call.1} parent=0
    _
  %s8 = ssub.s32 1, %s6
  %s9 = scalar_select 0, %s8, %s6
  $region1: #{tpu_custom_call.1} parent=0
    #allocation2 [shape = 'u8[8192]{0}', space=vmem, size = 0x2000, scoped, tag = 'output window, operand 0']
    #allocation3 [shape = 's32[2]{0}', space=sflag, size = 0x8, scoped, tag = 'scoped memory for tpu_custom_call.1']
    %10 = vsyncpa [#allocation3], 0
    %s11 = scalar_lea.sflag [#allocation3], 1
    %12 = vsyncpa %s11, 0
    loop: start=0, step=1, limit=4
    $region2: #{tpu_custom_call.1} parent=1 // loop_pre_header
      _
    $region3: #{tpu_custom_call.1} parent=1 // loop_header
      %s14 = sphi 0, %s18
      %p15 = scmp.ge.s32.totalorder %s14, 4
      %s24 = sphi 0, %s26
      %s27 = sphi 0, %s24
      %s28 = sphi 0, %s27
      %s44 = sphi 0, %s28
      %s50 = sphi 0, %s52
      %s53 = sphi 0, %s50
      %s54 = sphi 0, %s53
      %s70 = sphi 0, %s54
      %s74 = sphi 0, %s74
      %s76 = sphi 0, %s74
      %s77 = sphi 0, %s76
      %s91 = sphi 0, %s77
      %s95 = sphi 0, %s95
      %s97 = sphi 0, %s95
      %s98 = sphi 0, %s97
      %s112 = sphi 0, %s98
      %s116 = sphi 0, %s116
      %s118 = sphi 0, %s116
      %s119 = sphi 0, %s118
      %s133 = sphi 0, %s119
      %s139 = sphi 0, %s141
      %s142 = sphi 0, %s139
      %s143 = sphi 0, %s142
      %s159 = sphi 0, %s143
    $region4: #{tpu_custom_call.1} parent=1 // loop_header_branch
      %17 = sbr.rel (%p15) target = $region8
    $region5: #{tpu_custom_call.1} parent=1 // loop_body
      %s19 = ssub.s32 %s14, 1
      %s20 = ssub.s32 %s14, 2
      %s21 = sadd.s32 %s14, 1
      %s22 = ssub.s32 %s14, %s21
      %p23 = scmp.eq.s32.totalorder %s22, 0
      %s25 = sadd.s32 %s24, 1
      %s26 = scalar_select %p23, %s24, %s25
      %p29 = pneg %p23
      %p30 = scmp.eq.s32.totalorder %s14, 1
      %p31 = por %p29, %p30
      %p32 = scmp.ne.s32.totalorder %s24, %s27
      %p33 = scmp.eq.s32.totalorder %s14, 0
      %p34 = por %p32, %p33
      %p35 = scmp.ne.s32.totalorder %s24, %s27
      %p36 = scmp.eq.s32.totalorder %s19, 1
      %p37 = por %p35, %p36
      %p38 = scmp.ne.s32.totalorder %s27, %s28
      %p39 = scmp.eq.s32.totalorder %s19, 0
      %p40 = por %p38, %p39
      %p41 = scmp.ne.s32.totalorder %s27, %s28
      %p42 = scmp.eq.s32.totalorder %s20, 1
      %p43 = por %p41, %p42
      %p45 = scmp.ne.s32.totalorder %s28, %s44
      %p46 = scmp.eq.s32.totalorder %s20, 0
      %p47 = por %p45, %p46
      %s48 = ssub.s32 %s14, %s21
      %p49 = scmp.eq.s32.totalorder %s48, 0
      %s51 = sadd.s32 %s50, 1
      %s52 = scalar_select %p49, %s50, %s51
      %p55 = pneg %p49
      %p56 = scmp.eq.s32.totalorder %s14, 1
      %p57 = por %p55, %p56
      %p58 = scmp.ne.s32.totalorder %s50, %s53
      %p59 = scmp.eq.s32.totalorder %s14, 0
      %p60 = por %p58, %p59
      %p61 = scmp.ne.s32.totalorder %s50, %s53
      %p62 = scmp.eq.s32.totalorder %s19, 1
      %p63 = por %p61, %p62
      %p64 = scmp.ne.s32.totalorder %s53, %s54
      %p65 = scmp.eq.s32.totalorder %s19, 0
      %p66 = por %p64, %p65
      %p67 = scmp.ne.s32.totalorder %s53, %s54
      %p68 = scmp.eq.s32.totalorder %s20, 1
      %p69 = por %p67, %p68
      %p71 = scmp.ne.s32.totalorder %s54, %s70
      %p72 = scmp.eq.s32.totalorder %s20, 0
      %p73 = por %p71, %p72
      %s75 = sadd.s32 %s74, 1
      %p78 = scmp.eq.s32.totalorder %s14, 1
      %p79 = scmp.ne.s32.totalorder %s74, %s76
      %p80 = scmp.eq.s32.totalorder %s14, 0
      %p81 = por %p79, %p80
      %p82 = scmp.ne.s32.totalorder %s74, %s76
      %p83 = scmp.eq.s32.totalorder %s19, 1
      %p84 = por %p82, %p83
      %p85 = scmp.ne.s32.totalorder %s76, %s77
      %p86 = scmp.eq.s32.totalorder %s19, 0
      %p87 = por %p85, %p86
      %p88 = scmp.ne.s32.totalorder %s76, %s77
      %p89 = scmp.eq.s32.totalorder %s20, 1
      %p90 = por %p88, %p89
      %p92 = scmp.ne.s32.totalorder %s77, %s91
      %p93 = scmp.eq.s32.totalorder %s20, 0
      %p94 = por %p92, %p93
      %s96 = sadd.s32 %s95, 1
      %p99 = scmp.eq.s32.totalorder %s14, 1
      %p100 = scmp.ne.s32.totalorder %s95, %s97
      %p101 = scmp.eq.s32.totalorder %s14, 0
      %p102 = por %p100, %p101
      %p103 = scmp.ne.s32.totalorder %s95, %s97
      %p104 = scmp.eq.s32.totalorder %s19, 1
      %p105 = por %p103, %p104
      %p106 = scmp.ne.s32.totalorder %s97, %s98
      %p107 = scmp.eq.s32.totalorder %s19, 0
      %p108 = por %p106, %p107
      %p109 = scmp.ne.s32.totalorder %s97, %s98
      %p110 = scmp.eq.s32.totalorder %s20, 1
      %p111 = por %p109, %p110
      %p113 = scmp.ne.s32.totalorder %s98, %s112
      %p114 = scmp.eq.s32.totalorder %s20, 0
      %p115 = por %p113, %p114
      %s117 = sadd.s32 %s116, 1
      %p120 = scmp.eq.s32.totalorder %s14, 1
      %p121 = scmp.ne.s32.totalorder %s116, %s118
      %p122 = scmp.eq.s32.totalorder %s14, 0
      %p123 = por %p121, %p122
      %p124 = scmp.ne.s32.totalorder %s116, %s118
      %p125 = scmp.eq.s32.totalorder %s19, 1
      %p126 = por %p124, %p125
      %p127 = scmp.ne.s32.totalorder %s118, %s119
      %p128 = scmp.eq.s32.totalorder %s19, 0
      %p129 = por %p127, %p128
      %p130 = scmp.ne.s32.totalorder %s118, %s119
      %p131 = scmp.eq.s32.totalorder %s20, 1
      %p132 = por %p130, %p131
      %p134 = scmp.ne.s32.totalorder %s119, %s133
      %p135 = scmp.eq.s32.totalorder %s20, 0
      %p136 = por %p134, %p135
      %s137 = ssub.s32 %s14, %s21
      %p138 = scmp.eq.s32.totalorder %s137, 0
      %s140 = sadd.s32 %s139, 1
      %s141 = scalar_select %p138, %s139, %s140
      %p144 = pneg %p138
      %p145 = scmp.eq.s32.totalorder %s14, 1
      %p146 = por %p144, %p145
      %p147 = scmp.ne.s32.totalorder %s139, %s142
      %p148 = scmp.eq.s32.totalorder %s14, 0
      %p149 = por %p147, %p148
      %p150 = scmp.ne.s32.totalorder %s139, %s142
      %p151 = scmp.eq.s32.totalorder %s19, 1
      %p152 = por %p150, %p151
      %p153 = scmp.ne.s32.totalorder %s142, %s143
      %p154 = scmp.eq.s32.totalorder %s19, 0
      %p155 = por %p153, %p154
      %p156 = scmp.ne.s32.totalorder %s142, %s143
      %p157 = scmp.eq.s32.totalorder %s20, 1
      %p158 = por %p156, %p157
      %p160 = scmp.ne.s32.totalorder %s143, %s159
      %p161 = scmp.eq.s32.totalorder %s20, 0
      %p162 = por %p160, %p161
      %p163 = scmp.le.s32.totalorder 1, %s14
      %p164 = scmp.lt.s32.totalorder %s14, 3
      %p165 = pnand %p163, %p164
      %p166 = pneg %p165
      // Predicated region
      $region9: #{tpu_custom_call.1} parent=5 // pred_check
        _
      $region10: #{tpu_custom_call.1} parent=5 // pred_check_branch
        %168 = sbr.rel (%p165) target = $region12
      $region11: #{tpu_custom_call.1} parent=5 // pred_region
        %s169 = ssub.s32 %s14, 1
        // Predicated region
        $region13: #{tpu_custom_call.1} parent=11 // pred_check
          %p170 = pneg %p87
        $region14: #{tpu_custom_call.1} parent=11 // pred_check_branch
          %172 = sbr.rel (%p170) target = $region16
        $region15: #{tpu_custom_call.1} parent=11 // pred_region
          _
        $region16: #{tpu_custom_call.1} parent=11 // pred_fallthru
          _
        // Predicated region
        $region17: #{tpu_custom_call.1} parent=11 // pred_check
          %p173 = pneg %p108
        $region18: #{tpu_custom_call.1} parent=11 // pred_check_branch
          %175 = sbr.rel (%p173) target = $region20
        $region19: #{tpu_custom_call.1} parent=11 // pred_region
          _
        $region20: #{tpu_custom_call.1} parent=11 // pred_fallthru
          _
        // Predicated region
        $region21: #{tpu_custom_call.1} parent=11 // pred_check
          %p176 = pneg %p129
        $region22: #{tpu_custom_call.1} parent=11 // pred_check_branch
          %178 = sbr.rel (%p176) target = $region24
        $region23: #{tpu_custom_call.1} parent=11 // pred_region
          _
        $region24: #{tpu_custom_call.1} parent=11 // pred_fallthru
          _
      $region12: #{tpu_custom_call.1} parent=5 // pred_fallthru
        _
      %p179 = scmp.lt.s32.totalorder %s14, 2
      // Predicated region
      $region25: #{tpu_custom_call.1} parent=5 // pred_check
        %p180 = pneg %p179
      $region26: #{tpu_custom_call.1} parent=5 // pred_check_branch
        %182 = sbr.rel (%p180) target = $region28
      $region27: #{tpu_custom_call.1} parent=5 // pred_region
        // Predicated region
        $region29: #{tpu_custom_call.1} parent=27 // pred_check
          %p183 = pneg %p34
        $region30: #{tpu_custom_call.1} parent=27 // pred_check_branch
          %185 = sbr.rel (%p183) target = $region32
        $region31: #{tpu_custom_call.1} parent=27 // pred_region
          %s186 = smul.u32 8, %s14
          %p187 = scmp.lt.s32.totalorder %s186, 15
          %s188 = scalar_select %p187, %s186, 15
          %s189 = smul.addr %s188, 8
          %s190 = scalar_lea.vmem %s0, %s189
          %s191 = smul.u32 8, %s14
        $region32: #{tpu_custom_call.1} parent=27 // pred_fallthru
          _
        // Predicated region
        $region33: #{tpu_custom_call.1} parent=27 // pred_check
          %p192 = pneg %p60
        $region34: #{tpu_custom_call.1} parent=27 // pred_check_branch
          %194 = sbr.rel (%p192) target = $region36
        $region35: #{tpu_custom_call.1} parent=27 // pred_region
          %p195 = scmp.lt.s32.totalorder %s14, 1
          %s196 = scalar_select %p195, %s14, 1
          %s197 = smul.addr %s196, 8
          %s198 = scalar_lea.vmem %s1, %s197
        $region36: #{tpu_custom_call.1} parent=27 // pred_fallthru
          _
      $region28: #{tpu_custom_call.1} parent=5 // pred_fallthru
        _
      %p199 = scmp.le.s32.totalorder 1, %s14
      %p200 = scmp.lt.s32.totalorder %s14, 3
      %p201 = pnand %p199, %p200
      %p202 = pneg %p201
      // Predicated region
      $region37: #{tpu_custom_call.1} parent=5 // pred_check
        _
      $region38: #{tpu_custom_call.1} parent=5 // pred_check_branch
        %204 = sbr.rel (%p201) target = $region40
      $region39: #{tpu_custom_call.1} parent=5 // pred_region
        %s205 = ssub.s32 %s14, 1
        %s206 = smul.u32 8, %s19
        %p207 = scmp.lt.s32.totalorder %s206, 15
        %s208 = scalar_select %p207, %s206, 15
        %s209 = smul.addr %s208, 8
        %s210 = scalar_lea.vmem %s0, %s209
        %p211 = pneg %p40
        %p212 = pneg %p37
        %p213 = scmp.lt.s32.totalorder %s19, 1
        %s214 = scalar_select %p213, %s19, 1
        %s215 = smul.addr %s214, 8
        %s216 = scalar_lea.vmem %s1, %s215
        %p217 = pneg %p66
        %p218 = pneg %p63
        %p219 = pneg %p87
        %p220 = pneg %p84
        %p221 = pneg %p108
        %p222 = pneg %p105
        %p223 = pneg %p129
        %p224 = pneg %p126
        %p225 = pneg %p155
        %p226 = pneg %p152
        %s227 = sand.u32 %s142, 1
        %s228 = scalar_lea.sflag [#allocation3], %s227
        %s229 = sand.u32 %s142, 1
        %s230 = smul.addr %s229, 8
        %s231 = scalar_lea.vmem [#allocation2], %s230
        %s232 = smul.u32 8, %s19
        %p233 = scmp.lt.s32.totalorder %s232, 15
        %s234 = scalar_select %p233, %s232, 15
        %s235 = smul.addr %s234, 8
        %s236 = scalar_lea.vmem %s0, %s235
        %s237 = smul.u32 8, %s19
        %p238 = scmp.lt.s32.totalorder %s19, 1
        %s239 = scalar_select %p238, %s19, 1
        %s240 = smul.addr %s239, 8
        %s241 = scalar_lea.vmem %s1, %s240
        %v242 = vld [vmem:[%s236] sm:$0xff]
        %v243 = vld [vmem:[%s236 + $0x8] sm:$0xff]
        %v244 = vld [vmem:[%s236 + $0x10] sm:$0xff]
        %v245 = vld [vmem:[%s236 + $0x18] sm:$0xff]
        %v246 = vld [vmem:[%s236 + $0x20] sm:$0xff]
        %v247 = vld [vmem:[%s236 + $0x28] sm:$0xff]
        %v248 = vld [vmem:[%s236 + $0x30] sm:$0xff]
        %v249 = vld [vmem:[%s236 + $0x38] sm:$0xff]
        %v250 = vld [vmem:[%s2] sm:$0xff]
        %v251 = vld [vmem:[%s2 + $0x8] sm:$0xff]
        %v252 = vld [vmem:[%s2 + $0x10] sm:$0xff]
        %v253 = vld [vmem:[%s2 + $0x18] sm:$0xff]
        %v254 = vld [vmem:[%s2 + $0x20] sm:$0xff]
        %v255 = vld [vmem:[%s2 + $0x28] sm:$0xff]
        %v256 = vld [vmem:[%s2 + $0x30] sm:$0xff]
        %v257 = vld [vmem:[%s2 + $0x38] sm:$0xff]
        %v258 = vld [vmem:[%s2 + $0x40] sm:$0xff]
        %v259 = vld [vmem:[%s2 + $0x48] sm:$0xff]
        %v260 = vld [vmem:[%s2 + $0x50] sm:$0xff]
        %v261 = vld [vmem:[%s2 + $0x58] sm:$0xff]
        %v262 = vld [vmem:[%s2 + $0x60] sm:$0xff]
        %v263 = vld [vmem:[%s2 + $0x68] sm:$0xff]
        %v264 = vld [vmem:[%s2 + $0x70] sm:$0xff]
        %v265 = vld [vmem:[%s2 + $0x78] sm:$0xff]
        %266 = vmatprep.subr.mxu0 0.0
        %267 = vmatpush1.msra.mxu0 %v250
        %268 = vmatprep.subr.mxu0 0.0
        %269 = vmatpush1.msra.mxu0 %v251
        %270 = vmatprep.subr.mxu0 0.0
        %271 = vmatpush1.msra.mxu0 %v252
        %272 = vmatprep.subr.mxu0 0.0
        %273 = vmatpush1.msra.mxu0 %v253
        %274 = vmatprep.subr.mxu0 0.0
        %275 = vmatpush1.msra.mxu0 %v254
        %276 = vmatprep.subr.mxu0 0.0
        %277 = vmatpush1.msra.mxu0 %v255
        %278 = vmatprep.subr.mxu0 0.0
        %279 = vmatpush1.msra.mxu0 %v256
        %280 = vmatprep.subr.mxu0 0.0
        %281 = vmatpush1.msra.mxu0 %v257
        %282 = vmatprep.subr.mxu0 0.0
        %283 = vmatpush1.msra.mxu0 %v258
        %284 = vmatprep.subr.mxu0 0.0
        %285 = vmatpush1.msra.mxu0 %v259
        %286 = vmatprep.subr.mxu0 0.0
        %287 = vmatpush1.msra.mxu0 %v260
        %288 = vmatprep.subr.mxu0 0.0
        %289 = vmatpush1.msra.mxu0 %v261
        %290 = vmatprep.subr.mxu0 0.0
        %291 = vmatpush1.msra.mxu0 %v262
        %292 = vmatprep.subr.mxu0 0.0
        %293 = vmatpush1.msra.mxu0 %v263
        %294 = vmatprep.subr.mxu0 0.0
        %295 = vmatpush1.msra.mxu0 %v264
        %296 = vmatprep.subr.mxu0 0.0
        %297 = vmatpush1.msra.mxu0 %v265
        %298 = vmatprep.subr.mxu0 0.0
        %299 = vmatpush1.msra.mxu0 0.0
        %300 = vmatprep.subr.mxu0 0.0
        %301 = vmatpush1.msra.mxu0 0.0
        %302 = vmatprep.subr.mxu0 0.0
        %303 = vmatpush1.msra.mxu0 0.0
        %304 = vmatprep.subr.mxu0 0.0
        %305 = vmatpush1.msra.mxu0 0.0
        %306 = vmatprep.subr.mxu0 0.0
        %307 = vmatpush1.msra.mxu0 0.0
        %308 = vmatprep.subr.mxu0 0.0
        %309 = vmatpush1.msra.mxu0 0.0
        %310 = vmatprep.subr.mxu0 0.0
        %311 = vmatpush1.msra.mxu0 0.0
        %312 = vmatprep.subr.mxu0 0.0
        %313 = vmatpush1.msra.mxu0 0.0
        %314 = vmatprep.subr.mxu0 0.0
        %315 = vmatpush1.msra.mxu0 0.0
        %316 = vmatprep.subr.mxu0 0.0
        %317 = vmatpush1.msra.mxu0 0.0
        %318 = vmatprep.subr.mxu0 0.0
        %319 = vmatpush1.msra.mxu0 0.0
        %320 = vmatprep.subr.mxu0 0.0
        %321 = vmatpush1.msra.mxu0 0.0
        %322 = vmatprep.subr.mxu0 0.0
        %323 = vmatpush1.msra.mxu0 0.0
        %324 = vmatprep.subr.mxu0 0.0
        %325 = vmatpush1.msra.mxu0 0.0
        %326 = vmatprep.subr.mxu0 0.0
        %327 = vmatpush1.msra.mxu0 0.0
        %328 = vmatprep.subr.mxu0 0.0
        %329 = vmatpush1.msra.mxu0 0.0
        %330 = vmatprep.mubr.f32.mxu0 0.0
        %331 = vmatmul.mubr.f32.gmra.mrb[0].mxu0 %v242
        %v332 = vpop.f32.mrb[0].mxu0
        %v333 = vadd.f32 0.0, %v332
        %v334 = vpop.f32.mrb[0].mxu0
        %335 = vmatprep.mubr.f32.mxu0 0.0
        %336 = vmatmul.mubr.f32.gmra.mrb[0].mxu0 %v243
        %v337 = vpop.f32.mrb[0].mxu0
        %v338 = vadd.f32 0.0, %v337
        %v339 = vpop.f32.mrb[0].mxu0
        %340 = vmatprep.mubr.f32.mxu0 0.0
        %341 = vmatmul.mubr.f32.gmra.mrb[0].mxu0 %v244
        %v342 = vpop.f32.mrb[0].mxu0
        %v343 = vadd.f32 0.0, %v342
        %v344 = vpop.f32.mrb[0].mxu0
        %345 = vmatprep.mubr.f32.mxu0 0.0
        %346 = vmatmul.mubr.f32.gmra.mrb[0].mxu0 %v245
        %v347 = vpop.f32.mrb[0].mxu0
        %v348 = vadd.f32 0.0, %v347
        %v349 = vpop.f32.mrb[0].mxu0
        %350 = vmatprep.mubr.f32.mxu0 0.0
        %351 = vmatmul.mubr.f32.gmra.mrb[0].mxu0 %v246
        %v352 = vpop.f32.mrb[0].mxu0
        %v353 = vadd.f32 0.0, %v352
        %v354 = vpop.f32.mrb[0].mxu0
        %355 = vmatprep.mubr.f32.mxu0 0.0
        %356 = vmatmul.mubr.f32.gmra.mrb[0].mxu0 %v247
        %v357 = vpop.f32.mrb[0].mxu0
        %v358 = vadd.f32 0.0, %v357
        %v359 = vpop.f32.mrb[0].mxu0
        %360 = vmatprep.mubr.f32.mxu0 0.0
        %361 = vmatmul.mubr.f32.gmra.mrb[0].mxu0 %v248
        %v362 = vpop.f32.mrb[0].mxu0
        %v363 = vadd.f32 0.0, %v362
        %v364 = vpop.f32.mrb[0].mxu0
        %365 = vmatprep.mubr.f32.mxu0 0.0
        %366 = vmatmul.mubr.f32.gmra.mrb[0].mxu0 %v249
        %v367 = vpop.f32.mrb[0].mxu0
        %v368 = vadd.f32 0.0, %v367
        %v369 = vpop.f32.mrb[0].mxu0
        %370 = vdwg.mxu0
        %v371 = vld [vmem:[%s241] sm:$0xff]
        %v372 = vld [vmem:[%s3] sm:$0xff]
        %v373 = vld [vmem:[%s3 + $0x8] sm:$0xff]
        %v374 = vld [vmem:[%s3 + $0x10] sm:$0xff]
        %v375 = vld [vmem:[%s3 + $0x18] sm:$0xff]
        %vm376 = vcmask 261120
        %v378 = vsel %vm376, %v371, 0
        %380 = vmatprep.subr.mxu0 0.0
        %381 = vmatpush1.msra.mxu0 %v372
        %382 = vmatprep.subr.mxu0 0.0
        %383 = vmatpush1.msra.mxu0 %v373
        %384 = vmatprep.subr.mxu0 0.0
        %385 = vmatpush1.msra.mxu0 %v374
        %386 = vmatprep.subr.mxu0 0.0
        %387 = vmatpush1.msra.mxu0 %v375
        %388 = vmatprep.subr.mxu0 0.0
        %389 = vmatpush1.msra.mxu0 0.0
        %390 = vmatprep.subr.mxu0 0.0
        %391 = vmatpush1.msra.mxu0 0.0
        %392 = vmatprep.subr.mxu0 0.0
        %393 = vmatpush1.msra.mxu0 0.0
        %394 = vmatprep.subr.mxu0 0.0
        %395 = vmatpush1.msra.mxu0 0.0
        %396 = vmatprep.subr.mxu0 0.0
        %397 = vmatpush1.msra.mxu0 0.0
        %398 = vmatprep.subr.mxu0 0.0
        %399 = vmatpush1.msra.mxu0 0.0
        %400 = vmatprep.subr.mxu0 0.0
        %401 = vmatpush1.msra.mxu0 0.0
        %402 = vmatprep.subr.mxu0 0.0
        %403 = vmatpush1.msra.mxu0 0.0
        %404 = vmatprep.subr.mxu0 0.0
        %405 = vmatpush1.msra.mxu0 0.0
        %406 = vmatprep.subr.mxu0 0.0
        %407 = vmatpush1.msra.mxu0 0.0
        %408 = vmatprep.subr.mxu0 0.0
        %409 = vmatpush1.msra.mxu0 0.0
        %410 = vmatprep.subr.mxu0 0.0
        %411 = vmatpush1.msra.mxu0 0.0
        %412 = vmatprep.subr.mxu0 0.0
        %413 = vmatpush1.msra.mxu0 0.0
        %414 = vmatprep.subr.mxu0 0.0
        %415 = vmatpush1.msra.mxu0 0.0
        %416 = vmatprep.subr.mxu0 0.0
        %417 = vmatpush1.msra.mxu0 0.0
        %418 = vmatprep.subr.mxu0 0.0
        %419 = vmatpush1.msra.mxu0 0.0
        %420 = vmatprep.subr.mxu0 0.0
        %421 = vmatpush1.msra.mxu0 0.0
        %422 = vmatprep.subr.mxu0 0.0
        %423 = vmatpush1.msra.mxu0 0.0
        %424 = vmatprep.subr.mxu0 0.0
        %425 = vmatpush1.msra.mxu0 0.0
        %426 = vmatprep.subr.mxu0 0.0
        %427 = vmatpush1.msra.mxu0 0.0
        %428 = vmatprep.subr.mxu0 0.0
        %429 = vmatpush1.msra.mxu0 0.0
        %430 = vmatprep.subr.mxu0 0.0
        %431 = vmatpush1.msra.mxu0 0.0
        %432 = vmatprep.subr.mxu0 0.0
        %433 = vmatpush1.msra.mxu0 0.0
        %434 = vmatprep.subr.mxu0 0.0
        %435 = vmatpush1.msra.mxu0 0.0
        %436 = vmatprep.subr.mxu0 0.0
        %437 = vmatpush1.msra.mxu0 0.0
        %438 = vmatprep.subr.mxu0 0.0
        %439 = vmatpush1.msra.mxu0 0.0
        %440 = vmatprep.subr.mxu0 0.0
        %441 = vmatpush1.msra.mxu0 0.0
        %442 = vmatprep.subr.mxu0 0.0
        %443 = vmatpush1.msra.mxu0 0.0
        %444 = vmatprep.mubr.f32.mxu0 0.0
        %445 = vmatmul.mubr.f32.gmra.mrb[0].mxu0 %v378
        %v446 = vpop.f32.mrb[0].mxu0
        %v447 = vadd.f32 0.0, %v446
        %v448 = vpop.f32.mrb[0].mxu0
        %449 = vdwg.mxu0
        %v451 = vcombine.high %v447, %v447
        %v453 = vunpack.c.l.s4 1966171168
        %v454 = vunpack.c.0.s8 %v453
        %v455 = vlaneseq
        %v456 = vshrl.u32 %v455, 7
        %v457 = vsub.s32 %v454, %v456
        %v458 = vrot.slane %v447, %v457
        %v460 = vunpack.c.l.s4 1966171168
        %v461 = vunpack.c.0.s8 %v460
        %v462 = vlaneseq
        %v463 = vshrl.u32 %v462, 7
        %v464 = vsub.s32 %v461, %v463
        %v465 = vrot.slane %v451, %v464
        %v466 = vcombine.high %v458, %v458
        %v467 = vcombine.high %v465, %v465
        %v469 = vunpack.c.l.s4 1966171168
        %v470 = vunpack.c.0.s8 %v469
        %v471 = vlaneseq
        %v472 = vshrl.u32 %v471, 7
        %v473 = vsub.s32 %v470, %v472
        %v474 = vrot.slane %v458, %v473
        %v476 = vunpack.c.l.s4 1966171168
        %v477 = vunpack.c.0.s8 %v476
        %v478 = vlaneseq
        %v479 = vshrl.u32 %v478, 7
        %v480 = vsub.s32 %v477, %v479
        %v481 = vrot.slane %v465, %v480
        %v483 = vunpack.c.l.s4 1966171168
        %v484 = vunpack.c.0.s8 %v483
        %v485 = vlaneseq
        %v486 = vshrl.u32 %v485, 7
        %v487 = vsub.s32 %v484, %v486
        %v488 = vrot.slane %v466, %v487
        %v490 = vunpack.c.l.s4 1966171168
        %v491 = vunpack.c.0.s8 %v490
        %v492 = vlaneseq
        %v493 = vshrl.u32 %v492, 7
        %v494 = vsub.s32 %v491, %v493
        %v495 = vrot.slane %v467, %v494
        %v496 = vcombine.high %v474, %v474
        %v497 = vcombine.high %v481, %v481
        %v498 = vcombine.high %v488, %v488
        %v499 = vcombine.high %v495, %v495
        %v500 = vlaneseq
        %v501 = vshrl.u32 %v500, 7
        %v502 = vsub.s32 0, %v501
        %v503 = vrot.slane %v474, %v502
        %v504 = vlaneseq
        %v505 = vshrl.u32 %v504, 7
        %v506 = vsub.s32 0, %v505
        %v507 = vrot.slane %v488, %v506
        %v508 = vlaneseq
        %v509 = vshrl.u32 %v508, 7
        %v510 = vsub.s32 0, %v509
        %v511 = vrot.slane %v496, %v510
        %v512 = vlaneseq
        %v513 = vshrl.u32 %v512, 7
        %v514 = vsub.s32 0, %v513
        %v515 = vrot.slane %v498, %v514
        %v516 = vlaneseq
        %v517 = vshrl.u32 %v516, 7
        %v518 = vsub.s32 0, %v517
        %v519 = vrot.slane %v481, %v518
        %v520 = vlaneseq
        %v521 = vshrl.u32 %v520, 7
        %v522 = vsub.s32 0, %v521
        %v523 = vrot.slane %v495, %v522
        %v524 = vlaneseq
        %v525 = vshrl.u32 %v524, 7
        %v526 = vsub.s32 0, %v525
        %v527 = vrot.slane %v497, %v526
        %v528 = vlaneseq
        %v529 = vshrl.u32 %v528, 7
        %v530 = vsub.s32 0, %v529
        %v531 = vrot.slane %v499, %v530
        %v540 = vadd.f32 %v333, %v503
        %v541 = vadd.f32 %v338, %v507
        %v542 = vadd.f32 %v343, %v511
        %v543 = vadd.f32 %v348, %v515
        %v544 = vadd.f32 %v353, %v519
        %v545 = vadd.f32 %v358, %v523
        %v546 = vadd.f32 %v363, %v527
        %v547 = vadd.f32 %v368, %v531
        %v548 = vtanh.pop %v540
        %v549 = vtanh.pop %v541
        %v550 = vtanh.pop %v542
        %v551 = vtanh.pop %v543
        %v552 = vtanh.pop %v544
        %v553 = vtanh.pop %v545
        %v554 = vtanh.pop %v546
        %v555 = vtanh.pop %v547
        %v556 = vld [vmem:[%s4] sm:$0x1]
        %v558 = vlaneseq
        %v559 = vshrl.u32 %v558, 7
        %v560 = vsub.s32 0, %v559
        %v561 = vrot.slane %v556, %v560
        %v563 = vmul.f32 %v548, %v561
        %v564 = vmul.f32 %v549, %v561
        %v565 = vmul.f32 %v550, %v561
        %v566 = vmul.f32 %v551, %v561
        %v567 = vmul.f32 %v552, %v561
        %v568 = vmul.f32 %v553, %v561
        %v569 = vmul.f32 %v554, %v561
        %v570 = vmul.f32 %v555, %v561
        %vm571 = vcmask 523264
        %v572 = vsel %vm571, %v563, 0.0
        %573 = vadd.xlane.f32.xlu0 %v572
        %v574 = vpop.xlane.xlu0 %573
        %v575 = vsel %vm571, %v564, 0.0
        %576 = vadd.xlane.f32.xlu0 %v575
        %v577 = vpop.xlane.xlu0 %576
        %v578 = vsel %vm571, %v565, 0.0
        %579 = vadd.xlane.f32.xlu0 %v578
        %v580 = vpop.xlane.xlu0 %579
        %v581 = vsel %vm571, %v566, 0.0
        %582 = vadd.xlane.f32.xlu0 %v581
        %v583 = vpop.xlane.xlu0 %582
        %v584 = vsel %vm571, %v567, 0.0
        %585 = vadd.xlane.f32.xlu0 %v584
        %v586 = vpop.xlane.xlu0 %585
        %v587 = vsel %vm571, %v568, 0.0
        %588 = vadd.xlane.f32.xlu0 %v587
        %v589 = vpop.xlane.xlu0 %588
        %v590 = vsel %vm571, %v569, 0.0
        %591 = vadd.xlane.f32.xlu0 %v590
        %v592 = vpop.xlane.xlu0 %591
        %v593 = vsel %vm571, %v570, 0.0
        %594 = vadd.xlane.f32.xlu0 %v593
        %v595 = vpop.xlane.xlu0 %594
        %v604 = vlaneseq
        %v605 = vand.u32 %v604, 127
        %v606 = vlaneseq
        %v607 = vshrl.u32 %v606, 7
        %v608 = vsub.s32 %v605, %v607
        %v609 = vrot.slane %v574, %v608
        %v610 = vlaneseq
        %v611 = vshrl.u32 %v610, 7
        %v612 = vsub.s32 %v605, %v611
        %v613 = vrot.slane %v577, %v612
        %v614 = vlaneseq
        %v615 = vshrl.u32 %v614, 7
        %v616 = vsub.s32 %v605, %v615
        %v617 = vrot.slane %v580, %v616
        %v618 = vlaneseq
        %v619 = vshrl.u32 %v618, 7
        %v620 = vsub.s32 %v605, %v619
        %v621 = vrot.slane %v583, %v620
        %v622 = vlaneseq
        %v623 = vshrl.u32 %v622, 7
        %v624 = vsub.s32 %v605, %v623
        %v625 = vrot.slane %v586, %v624
        %v626 = vlaneseq
        %v627 = vshrl.u32 %v626, 7
        %v628 = vsub.s32 %v605, %v627
        %v629 = vrot.slane %v589, %v628
        %v630 = vlaneseq
        %v631 = vshrl.u32 %v630, 7
        %v632 = vsub.s32 %v605, %v631
        %v633 = vrot.slane %v592, %v632
        %v634 = vlaneseq
        %v635 = vshrl.u32 %v634, 7
        %v636 = vsub.s32 %v605, %v635
        %v637 = vrot.slane %v595, %v636
        %vm638 = vcmask 1041409
        %v639 = vsel %vm638, %v613, %v609
        %vm640 = vcmask 1042434
        %v641 = vsel %vm640, %v617, %v639
        %vm642 = vcmask 1043459
        %v643 = vsel %vm642, %v621, %v641
        %vm644 = vcmask 1044484
        %v645 = vsel %vm644, %v625, %v643
        %vm646 = vcmask 1045509
        %v647 = vsel %vm646, %v629, %v645
        %vm648 = vcmask 1046534
        %v649 = vsel %vm648, %v633, %v647
        %vm650 = vcmask 1047559
        %v651 = vsel %vm650, %v637, %v649
        %vm653 = vcmask 64512
        %v654 = vsel %vm653, %v651, -inf
        %655 = vmax.xlane.f32.xlu0 %v654
        %v656 = vpop.xlane.xlu0 %655
        %v658 = vlaneseq
        %v659 = vshrl.u32 %v658, 7
        %v660 = vsub.s32 0, %v659
        %v661 = vrot.slane %v656, %v660
        %v662 = vlaneseq
        %v663 = vshrl.u32 %v662, 7
        %v664 = vsub.s32 1, %v663
        %v665 = vrot.slane %v656, %v664
        %v666 = vlaneseq
        %v667 = vshrl.u32 %v666, 7
        %v668 = vsub.s32 2, %v667
        %v669 = vrot.slane %v656, %v668
        %v670 = vlaneseq
        %v671 = vshrl.u32 %v670, 7
        %v672 = vsub.s32 3, %v671
        %v673 = vrot.slane %v656, %v672
        %v674 = vlaneseq
        %v675 = vshrl.u32 %v674, 7
        %v676 = vsub.s32 4, %v675
        %v677 = vrot.slane %v656, %v676
        %v678 = vlaneseq
        %v679 = vshrl.u32 %v678, 7
        %v680 = vsub.s32 5, %v679
        %v681 = vrot.slane %v656, %v680
        %v682 = vlaneseq
        %v683 = vshrl.u32 %v682, 7
        %v684 = vsub.s32 6, %v683
        %v685 = vrot.slane %v656, %v684
        %v686 = vlaneseq
        %v687 = vshrl.u32 %v686, 7
        %v688 = vsub.s32 7, %v687
        %v689 = vrot.slane %v656, %v688
        %v698 = vsub.f32 %v574, %v661
        %v699 = vsub.f32 %v577, %v665
        %v700 = vsub.f32 %v580, %v669
        %v701 = vsub.f32 %v583, %v673
        %v702 = vsub.f32 %v586, %v677
        %v703 = vsub.f32 %v589, %v681
        %v704 = vsub.f32 %v592, %v685
        %v705 = vsub.f32 %v595, %v689
        %v706 = vmul.f32 %v698, 1.442695
        %v707 = vpow.pop %v706
        %v708 = vmul.f32 %v699, 1.442695
        %v709 = vpow.pop %v708
        %v710 = vmul.f32 %v700, 1.442695
        %v711 = vpow.pop %v710
        %v712 = vmul.f32 %v701, 1.442695
        %v713 = vpow.pop %v712
        %v714 = vmul.f32 %v702, 1.442695
        %v715 = vpow.pop %v714
        %v716 = vmul.f32 %v703, 1.442695
        %v717 = vpow.pop %v716
        %v718 = vmul.f32 %v704, 1.442695
        %v719 = vpow.pop %v718
        %v720 = vmul.f32 %v705, 1.442695
        %v721 = vpow.pop %v720
        %730 = vset.pattern.permute.xlu0 0
        %731 = vperm.xlu0 %730, %v707
        %v732 = vpop.permute.xlu0 %731
        %733 = vset.pattern.permute.xlu0 0
        %734 = vperm.xlu0 %733, %v709
        %v735 = vpop.permute.xlu0 %734
        %736 = vset.pattern.permute.xlu0 0
        %737 = vperm.xlu0 %736, %v711
        %v738 = vpop.permute.xlu0 %737
        %739 = vset.pattern.permute.xlu0 0
        %740 = vperm.xlu0 %739, %v713
        %v741 = vpop.permute.xlu0 %740
        %742 = vset.pattern.permute.xlu0 0
        %743 = vperm.xlu0 %742, %v715
        %v744 = vpop.permute.xlu0 %743
        %745 = vset.pattern.permute.xlu0 0
        %746 = vperm.xlu0 %745, %v717
        %v747 = vpop.permute.xlu0 %746
        %748 = vset.pattern.permute.xlu0 0
        %749 = vperm.xlu0 %748, %v719
        %v750 = vpop.permute.xlu0 %749
        %751 = vset.pattern.permute.xlu0 0
        %752 = vperm.xlu0 %751, %v721
        %v753 = vpop.permute.xlu0 %752
        %v754 = vlaneseq
        %v755 = vshrl.u32 %v754, 7
        %v756 = vsub.s32 %v605, %v755
        %v757 = vrot.slane %v732, %v756
        %v758 = vlaneseq
        %v759 = vshrl.u32 %v758, 7
        %v760 = vsub.s32 %v605, %v759
        %v761 = vrot.slane %v735, %v760
        %v762 = vlaneseq
        %v763 = vshrl.u32 %v762, 7
        %v764 = vsub.s32 %v605, %v763
        %v765 = vrot.slane %v738, %v764
        %v766 = vlaneseq
        %v767 = vshrl.u32 %v766, 7
        %v768 = vsub.s32 %v605, %v767
        %v769 = vrot.slane %v741, %v768
        %v770 = vlaneseq
        %v771 = vshrl.u32 %v770, 7
        %v772 = vsub.s32 %v605, %v771
        %v773 = vrot.slane %v744, %v772
        %v774 = vlaneseq
        %v775 = vshrl.u32 %v774, 7
        %v776 = vsub.s32 %v605, %v775
        %v777 = vrot.slane %v747, %v776
        %v778 = vlaneseq
        %v779 = vshrl.u32 %v778, 7
        %v780 = vsub.s32 %v605, %v779
        %v781 = vrot.slane %v750, %v780
        %v782 = vlaneseq
        %v783 = vshrl.u32 %v782, 7
        %v784 = vsub.s32 %v605, %v783
        %v785 = vrot.slane %v753, %v784
        %v786 = vsel %vm638, %v761, %v757
        %v787 = vsel %vm640, %v765, %v786
        %v788 = vsel %vm642, %v769, %v787
        %v789 = vsel %vm644, %v773, %v788
        %v790 = vsel %vm646, %v777, %v789
        %v791 = vsel %vm648, %v781, %v790
        %v792 = vsel %vm650, %v785, %v791
        %v794 = vsel %vm653, %v792, 0.0
        %795 = vadd.xlane.f32.xlu0 %v794
        %v796 = vpop.xlane.xlu0 %795
        %v797 = vrcp.pop %v796
        %v799 = vlaneseq
        %v800 = vshrl.u32 %v799, 7
        %v801 = vsub.s32 0, %v800
        %v802 = vrot.slane %v797, %v801
        %v803 = vlaneseq
        %v804 = vshrl.u32 %v803, 7
        %v805 = vsub.s32 1, %v804
        %v806 = vrot.slane %v797, %v805
        %v807 = vlaneseq
        %v808 = vshrl.u32 %v807, 7
        %v809 = vsub.s32 2, %v808
        %v810 = vrot.slane %v797, %v809
        %v811 = vlaneseq
        %v812 = vshrl.u32 %v811, 7
        %v813 = vsub.s32 3, %v812
        %v814 = vrot.slane %v797, %v813
        %v815 = vlaneseq
        %v816 = vshrl.u32 %v815, 7
        %v817 = vsub.s32 4, %v816
        %v818 = vrot.slane %v797, %v817
        %v819 = vlaneseq
        %v820 = vshrl.u32 %v819, 7
        %v821 = vsub.s32 5, %v820
        %v822 = vrot.slane %v797, %v821
        %v823 = vlaneseq
        %v824 = vshrl.u32 %v823, 7
        %v825 = vsub.s32 6, %v824
        %v826 = vrot.slane %v797, %v825
        %v827 = vlaneseq
        %v828 = vshrl.u32 %v827, 7
        %v829 = vsub.s32 7, %v828
        %v830 = vrot.slane %v797, %v829
        %v839 = vmul.f32 %v707, %v802
        %v840 = vmul.f32 %v709, %v806
        %v841 = vmul.f32 %v711, %v810
        %v842 = vmul.f32 %v713, %v814
        %v843 = vmul.f32 %v715, %v818
        %v844 = vmul.f32 %v717, %v822
        %v845 = vmul.f32 %v719, %v826
        %v846 = vmul.f32 %v721, %v830
        %848 = vset.pattern.permute.xlu0 0
        %849 = vperm.xlu0 %848, %v839
        %v850 = vpop.permute.xlu0 %849
        %853 = vset.pattern.permute.xlu0 0
        %854 = vperm.xlu0 %853, %v840
        %v855 = vpop.permute.xlu0 %854
        %858 = vset.pattern.permute.xlu0 0
        %859 = vperm.xlu0 %858, %v841
        %v860 = vpop.permute.xlu0 %859
        %863 = vset.pattern.permute.xlu0 0
        %864 = vperm.xlu0 %863, %v842
        %v865 = vpop.permute.xlu0 %864
        %868 = vset.pattern.permute.xlu0 0
        %869 = vperm.xlu0 %868, %v843
        %v870 = vpop.permute.xlu0 %869
        %873 = vset.pattern.permute.xlu0 0
        %874 = vperm.xlu0 %873, %v844
        %v875 = vpop.permute.xlu0 %874
        %878 = vset.pattern.permute.xlu0 0
        %879 = vperm.xlu0 %878, %v845
        %v880 = vpop.permute.xlu0 %879
        %883 = vset.pattern.permute.xlu0 0
        %884 = vperm.xlu0 %883, %v846
        %v885 = vpop.permute.xlu0 %884
        %v887 = vmul.f32 %v850, %v242
        %v888 = vmul.f32 %v855, %v243
        %v889 = vmul.f32 %v860, %v244
        %v890 = vmul.f32 %v865, %v245
        %v891 = vmul.f32 %v870, %v246
        %v892 = vmul.f32 %v875, %v247
        %v893 = vmul.f32 %v880, %v248
        %v894 = vmul.f32 %v885, %v249
        %v895 = vrot.slane %v887, 4
        %v896 = vadd.f32 %v887, %v895
        %v897 = vrot.slane %v896, 2
        %v898 = vadd.f32 %v896, %v897
        %v899 = vrot.slane %v898, 1
        %v900 = vadd.f32 %v898, %v899
        %v901 = vrot.slane %v888, 4
        %v902 = vadd.f32 %v888, %v901
        %v903 = vrot.slane %v902, 2
        %v904 = vadd.f32 %v902, %v903
        %v905 = vrot.slane %v904, 1
        %v906 = vadd.f32 %v904, %v905
        %v907 = vrot.slane %v889, 4
        %v908 = vadd.f32 %v889, %v907
        %v909 = vrot.slane %v908, 2
        %v910 = vadd.f32 %v908, %v909
        %v911 = vrot.slane %v910, 1
        %v912 = vadd.f32 %v910, %v911
        %v913 = vrot.slane %v890, 4
        %v914 = vadd.f32 %v890, %v913
        %v915 = vrot.slane %v914, 2
        %v916 = vadd.f32 %v914, %v915
        %v917 = vrot.slane %v916, 1
        %v918 = vadd.f32 %v916, %v917
        %v919 = vrot.slane %v891, 4
        %v920 = vadd.f32 %v891, %v919
        %v921 = vrot.slane %v920, 2
        %v922 = vadd.f32 %v920, %v921
        %v923 = vrot.slane %v922, 1
        %v924 = vadd.f32 %v922, %v923
        %v925 = vrot.slane %v892, 4
        %v926 = vadd.f32 %v892, %v925
        %v927 = vrot.slane %v926, 2
        %v928 = vadd.f32 %v926, %v927
        %v929 = vrot.slane %v928, 1
        %v930 = vadd.f32 %v928, %v929
        %v931 = vrot.slane %v893, 4
        %v932 = vadd.f32 %v893, %v931
        %v933 = vrot.slane %v932, 2
        %v934 = vadd.f32 %v932, %v933
        %v935 = vrot.slane %v934, 1
        %v936 = vadd.f32 %v934, %v935
        %v937 = vrot.slane %v894, 4
        %v938 = vadd.f32 %v894, %v937
        %v939 = vrot.slane %v938, 2
        %v940 = vadd.f32 %v938, %v939
        %v941 = vrot.slane %v940, 1
        %v942 = vadd.f32 %v940, %v941
        %v943 = vadd.f32 %v900, 0.0
        %v944 = vadd.f32 %v906, 0.0
        %v945 = vadd.f32 %v912, 0.0
        %v946 = vadd.f32 %v918, 0.0
        %v947 = vadd.f32 %v924, 0.0
        %v948 = vadd.f32 %v930, 0.0
        %v949 = vadd.f32 %v936, 0.0
        %v950 = vadd.f32 %v942, 0.0
        %v959 = vsel %vm638, %v944, %v943
        %v960 = vsel %vm640, %v945, %v959
        %v961 = vsel %vm642, %v946, %v960
        %v962 = vsel %vm644, %v947, %v961
        %v963 = vsel %vm646, %v948, %v962
        %v964 = vsel %vm648, %v949, %v963
        %v965 = vsel %vm650, %v950, %v964
        %967 = vst [vmem:[%s231] sm:$0xff] %v965
        %s968 = sand.u32 %s142, 1
        %s969 = scalar_lea.sflag [#allocation3], %s968
        %s970 = sand.u32 %s142, 1
        %s971 = smul.addr %s970, 8
        %s972 = scalar_lea.vmem [#allocation2], %s971
        // Predicated region
        $region41: #{tpu_custom_call.1} parent=39 // pred_check
          %p973 = pneg %p152
        $region42: #{tpu_custom_call.1} parent=39 // pred_check_branch
          %975 = sbr.rel (%p973) target = $region44
        $region43: #{tpu_custom_call.1} parent=39 // pred_region
          %s977 = ssub.s32 128, 128
          %978 = vsyncadd %s969, %s977
          %s979 = smul.addr %s19, 128
          %s980 = scalar_lea.hbm %s5, %s979
          %s982 = sshll.u32 %s972, 4
          %s983 = int_to_ptr.vmem [resolvable:$true] %s982
          %985 = dma.vmem_to_hbm [thread:$0]  %s983, 128, %s980, %s969
        $region44: #{tpu_custom_call.1} parent=39 // pred_fallthru
          _
      $region40: #{tpu_custom_call.1} parent=5 // pred_fallthru
        _
      %p986 = scmp.le.s32.totalorder 2, %s14
      // Predicated region
      $region45: #{tpu_custom_call.1} parent=5 // pred_check
        %p987 = pneg %p986
      $region46: #{tpu_custom_call.1} parent=5 // pred_check_branch
        %989 = sbr.rel (%p987) target = $region48
      $region47: #{tpu_custom_call.1} parent=5 // pred_region
        %s990 = ssub.s32 %s14, 2
        // Predicated region
        $region49: #{tpu_custom_call.1} parent=47 // pred_check
          %p991 = pneg %p158
        $region50: #{tpu_custom_call.1} parent=47 // pred_check_branch
          %993 = sbr.rel (%p991) target = $region52
        $region51: #{tpu_custom_call.1} parent=47 // pred_region
          %s994 = sand.u32 %s143, 1
          %s995 = scalar_lea.sflag [#allocation3], %s994
          %s996 = sand.u32 %s143, 1
          %s997 = smul.addr %s996, 8
          %s998 = scalar_lea.vmem [#allocation2], %s997
          %999 = dma.done %s995, 128
        $region52: #{tpu_custom_call.1} parent=47 // pred_fallthru
          _
      $region48: #{tpu_custom_call.1} parent=5 // pred_fallthru
        _
    $region6: #{tpu_custom_call.1} parent=1 // loop_footer
      %s18 = sadd.s32 1, %s14
    $region7: #{tpu_custom_call.1} parent=1 // loop_footer_branch
      %13 = sbr.rel target = $region3
    $region8: #{tpu_custom_call.1} parent=1 // loop_exit
      _
    %1000 = vsyncpa [#allocation3], 1
    %s1001 = scalar_lea.sflag [#allocation3], 1
    %1002 = vsyncpa %s1001, 1

// kernel: tpu_custom_call.1
$region0: #{tpu_custom_call.1}
  #allocation0 [shape = 'u32[]', space=smem, size = 0x4, offset = 0x4, fixed_abs, tag = 'smem constant byte address 0x4 - core index']
  #allocation1 [shape = 'u32[144,128]{1,0:T(1,128)}', space=vmem, size = 0x12000, scoped, tag = 'internal scratch']
  %s0 = inlined_call_operand.vmem [shape: f32[16,8,128], index: 0, kind: input, shape index: {}]
  %s1 = inlined_call_operand.vmem [shape: f32[16,32], index: 1, kind: input, shape index: {}]
  %s2 = inlined_call_operand.vmem [shape: f32[128,64], index: 2, kind: input, shape index: {}]
  %s3 = inlined_call_operand.vmem [shape: f32[32,64], index: 3, kind: input, shape index: {}]
  %s4 = inlined_call_operand.vmem [shape: f32[1,64], index: 4, kind: input, shape index: {}]
  %s5 = inlined_call_operand.hbm [shape: f32[16,128], index: 5, kind: output, shape index: {}]
  %s6 = sld [smem:[#allocation0]]
  $region53: #{tpu_custom_call.1} parent=0
    _
  %s8 = ssub.s32 1, %s6
  %s9 = scalar_select 0, %s8, %s6
  $region1: #{tpu_custom_call.1} parent=0
    #allocation2 [shape = 'u8[8192]{0}', space=vmem, size = 0x2000, scoped, tag = 'output window, operand 0']
    #allocation3 [shape = 's32[2]{0}', space=sflag, size = 0x8, scoped, tag = 'scoped memory for tpu_custom_call.1']
    %10 = vsyncpa [#allocation3], 0
    %s11 = scalar_lea.sflag [#allocation3], 1
    %12 = vsyncpa %s11, 0
    loop: start=0, step=1, limit=4
    $region2: #{tpu_custom_call.1} parent=1 // loop_pre_header
      _
    $region3: #{tpu_custom_call.1} parent=1 // loop_header
      %s14 = sphi 0, %s18
      %p15 = scmp.ge.s32.totalorder %s14, 4
      %s24 = sphi 0, %s26
      %s27 = sphi 0, %s24
      %s28 = sphi 0, %s27
      %s44 = sphi 0, %s28
      %s50 = sphi 0, %s52
      %s53 = sphi 0, %s50
      %s54 = sphi 0, %s53
      %s70 = sphi 0, %s54
      %s74 = sphi 0, %s74
      %s76 = sphi 0, %s74
      %s77 = sphi 0, %s76
      %s91 = sphi 0, %s77
      %s95 = sphi 0, %s95
      %s97 = sphi 0, %s95
      %s98 = sphi 0, %s97
      %s112 = sphi 0, %s98
      %s116 = sphi 0, %s116
      %s118 = sphi 0, %s116
      %s119 = sphi 0, %s118
      %s133 = sphi 0, %s119
      %s139 = sphi 0, %s141
      %s142 = sphi 0, %s139
      %s143 = sphi 0, %s142
      %s159 = sphi 0, %s143
    $region4: #{tpu_custom_call.1} parent=1 // loop_header_branch
      %17 = sbr.rel (%p15) target = $region8
    $region5: #{tpu_custom_call.1} parent=1 // loop_body
      %s19 = ssub.s32 %s14, 1
      %s20 = ssub.s32 %s14, 2
      %s21 = sadd.s32 %s14, 1
      %s22 = ssub.s32 %s14, %s21
      %p23 = scmp.eq.s32.totalorder %s22, 0
      %s25 = sadd.s32 %s24, 1
      %s26 = scalar_select %p23, %s24, %s25
      %p29 = pneg %p23
      %p30 = scmp.eq.s32.totalorder %s14, 1
      %p31 = por %p29, %p30
      %p32 = scmp.ne.s32.totalorder %s24, %s27
      %p33 = scmp.eq.s32.totalorder %s14, 0
      %p34 = por %p32, %p33
      %p35 = scmp.ne.s32.totalorder %s24, %s27
      %p36 = scmp.eq.s32.totalorder %s19, 1
      %p37 = por %p35, %p36
      %p38 = scmp.ne.s32.totalorder %s27, %s28
      %p39 = scmp.eq.s32.totalorder %s19, 0
      %p40 = por %p38, %p39
      %p41 = scmp.ne.s32.totalorder %s27, %s28
      %p42 = scmp.eq.s32.totalorder %s20, 1
      %p43 = por %p41, %p42
      %p45 = scmp.ne.s32.totalorder %s28, %s44
      %p46 = scmp.eq.s32.totalorder %s20, 0
      %p47 = por %p45, %p46
      %s48 = ssub.s32 %s14, %s21
      %p49 = scmp.eq.s32.totalorder %s48, 0
      %s51 = sadd.s32 %s50, 1
      %s52 = scalar_select %p49, %s50, %s51
      %p55 = pneg %p49
      %p56 = scmp.eq.s32.totalorder %s14, 1
      %p57 = por %p55, %p56
      %p58 = scmp.ne.s32.totalorder %s50, %s53
      %p59 = scmp.eq.s32.totalorder %s14, 0
      %p60 = por %p58, %p59
      %p61 = scmp.ne.s32.totalorder %s50, %s53
      %p62 = scmp.eq.s32.totalorder %s19, 1
      %p63 = por %p61, %p62
      %p64 = scmp.ne.s32.totalorder %s53, %s54
      %p65 = scmp.eq.s32.totalorder %s19, 0
      %p66 = por %p64, %p65
      %p67 = scmp.ne.s32.totalorder %s53, %s54
      %p68 = scmp.eq.s32.totalorder %s20, 1
      %p69 = por %p67, %p68
      %p71 = scmp.ne.s32.totalorder %s54, %s70
      %p72 = scmp.eq.s32.totalorder %s20, 0
      %p73 = por %p71, %p72
      %s75 = sadd.s32 %s74, 1
      %p78 = scmp.eq.s32.totalorder %s14, 1
      %p79 = scmp.ne.s32.totalorder %s74, %s76
      %p80 = scmp.eq.s32.totalorder %s14, 0
      %p81 = por %p79, %p80
      %p82 = scmp.ne.s32.totalorder %s74, %s76
      %p83 = scmp.eq.s32.totalorder %s19, 1
      %p84 = por %p82, %p83
      %p85 = scmp.ne.s32.totalorder %s76, %s77
      %p86 = scmp.eq.s32.totalorder %s19, 0
      %p87 = por %p85, %p86
      %p88 = scmp.ne.s32.totalorder %s76, %s77
      %p89 = scmp.eq.s32.totalorder %s20, 1
      %p90 = por %p88, %p89
      %p92 = scmp.ne.s32.totalorder %s77, %s91
      %p93 = scmp.eq.s32.totalorder %s20, 0
      %p94 = por %p92, %p93
      %s96 = sadd.s32 %s95, 1
      %p99 = scmp.eq.s32.totalorder %s14, 1
      %p100 = scmp.ne.s32.totalorder %s95, %s97
      %p101 = scmp.eq.s32.totalorder %s14, 0
      %p102 = por %p100, %p101
      %p103 = scmp.ne.s32.totalorder %s95, %s97
      %p104 = scmp.eq.s32.totalorder %s19, 1
      %p105 = por %p103, %p104
      %p106 = scmp.ne.s32.totalorder %s97, %s98
      %p107 = scmp.eq.s32.totalorder %s19, 0
      %p108 = por %p106, %p107
      %p109 = scmp.ne.s32.totalorder %s97, %s98
      %p110 = scmp.eq.s32.totalorder %s20, 1
      %p111 = por %p109, %p110
      %p113 = scmp.ne.s32.totalorder %s98, %s112
      %p114 = scmp.eq.s32.totalorder %s20, 0
      %p115 = por %p113, %p114
      %s117 = sadd.s32 %s116, 1
      %p120 = scmp.eq.s32.totalorder %s14, 1
      %p121 = scmp.ne.s32.totalorder %s116, %s118
      %p122 = scmp.eq.s32.totalorder %s14, 0
      %p123 = por %p121, %p122
      %p124 = scmp.ne.s32.totalorder %s116, %s118
      %p125 = scmp.eq.s32.totalorder %s19, 1
      %p126 = por %p124, %p125
      %p127 = scmp.ne.s32.totalorder %s118, %s119
      %p128 = scmp.eq.s32.totalorder %s19, 0
      %p129 = por %p127, %p128
      %p130 = scmp.ne.s32.totalorder %s118, %s119
      %p131 = scmp.eq.s32.totalorder %s20, 1
      %p132 = por %p130, %p131
      %p134 = scmp.ne.s32.totalorder %s119, %s133
      %p135 = scmp.eq.s32.totalorder %s20, 0
      %p136 = por %p134, %p135
      %s137 = ssub.s32 %s14, %s21
      %p138 = scmp.eq.s32.totalorder %s137, 0
      %s140 = sadd.s32 %s139, 1
      %s141 = scalar_select %p138, %s139, %s140
      %p144 = pneg %p138
      %p145 = scmp.eq.s32.totalorder %s14, 1
      %p146 = por %p144, %p145
      %p147 = scmp.ne.s32.totalorder %s139, %s142
      %p148 = scmp.eq.s32.totalorder %s14, 0
      %p149 = por %p147, %p148
      %p150 = scmp.ne.s32.totalorder %s139, %s142
      %p151 = scmp.eq.s32.totalorder %s19, 1
      %p152 = por %p150, %p151
      %p153 = scmp.ne.s32.totalorder %s142, %s143
      %p154 = scmp.eq.s32.totalorder %s19, 0
      %p155 = por %p153, %p154
      %p156 = scmp.ne.s32.totalorder %s142, %s143
      %p157 = scmp.eq.s32.totalorder %s20, 1
      %p158 = por %p156, %p157
      %p160 = scmp.ne.s32.totalorder %s143, %s159
      %p161 = scmp.eq.s32.totalorder %s20, 0
      %p162 = por %p160, %p161
      %p163 = scmp.le.s32.totalorder 1, %s14
      %p164 = scmp.lt.s32.totalorder %s14, 3
      %p165 = pnand %p163, %p164
      %p166 = pneg %p165
      // Predicated region
      $region9: #{tpu_custom_call.1} parent=5 // pred_check
        _
      $region10: #{tpu_custom_call.1} parent=5 // pred_check_branch
        %168 = sbr.rel (%p165) target = $region12
      $region11: #{tpu_custom_call.1} parent=5 // pred_region
        %s169 = ssub.s32 %s14, 1
        // Predicated region
        $region13: #{tpu_custom_call.1} parent=11 // pred_check
          %p170 = pneg %p87
        $region14: #{tpu_custom_call.1} parent=11 // pred_check_branch
          %172 = sbr.rel (%p170) target = $region16
        $region15: #{tpu_custom_call.1} parent=11 // pred_region
          _
        $region16: #{tpu_custom_call.1} parent=11 // pred_fallthru
          _
        // Predicated region
        $region17: #{tpu_custom_call.1} parent=11 // pred_check
          %p173 = pneg %p108
        $region18: #{tpu_custom_call.1} parent=11 // pred_check_branch
          %175 = sbr.rel (%p173) target = $region20
        $region19: #{tpu_custom_call.1} parent=11 // pred_region
          _
        $region20: #{tpu_custom_call.1} parent=11 // pred_fallthru
          _
        // Predicated region
        $region21: #{tpu_custom_call.1} parent=11 // pred_check
          %p176 = pneg %p129
        $region22: #{tpu_custom_call.1} parent=11 // pred_check_branch
          %178 = sbr.rel (%p176) target = $region24
        $region23: #{tpu_custom_call.1} parent=11 // pred_region
          _
        $region24: #{tpu_custom_call.1} parent=11 // pred_fallthru
          _
      $region12: #{tpu_custom_call.1} parent=5 // pred_fallthru
        _
      %p179 = scmp.lt.s32.totalorder %s14, 2
      // Predicated region
      $region25: #{tpu_custom_call.1} parent=5 // pred_check
        %p180 = pneg %p179
      $region26: #{tpu_custom_call.1} parent=5 // pred_check_branch
        %182 = sbr.rel (%p180) target = $region28
      $region27: #{tpu_custom_call.1} parent=5 // pred_region
        // Predicated region
        $region29: #{tpu_custom_call.1} parent=27 // pred_check
          %p183 = pneg %p34
        $region30: #{tpu_custom_call.1} parent=27 // pred_check_branch
          %185 = sbr.rel (%p183) target = $region32
        $region31: #{tpu_custom_call.1} parent=27 // pred_region
          %s186 = smul.u32 8, %s14
          %p187 = scmp.lt.s32.totalorder %s186, 15
          %s188 = scalar_select %p187, %s186, 15
          %s189 = smul.addr %s188, 8
          %s190 = scalar_lea.vmem %s0, %s189
          %s191 = smul.u32 8, %s14
        $region32: #{tpu_custom_call.1} parent=27 // pred_fallthru
          _
        // Predicated region
        $region33: #{tpu_custom_call.1} parent=27 // pred_check
          %p192 = pneg %p60
        $region34: #{tpu_custom_call.1} parent=27 // pred_check_branch
          %194 = sbr.rel (%p192) target = $region36
        $region35: #{tpu_custom_call.1} parent=27 // pred_region
          %p195 = scmp.lt.s32.totalorder %s14, 1
          %s196 = scalar_select %p195, %s14, 1
          %s197 = smul.addr %s196, 8
          %s198 = scalar_lea.vmem %s1, %s197
        $region36: #{tpu_custom_call.1} parent=27 // pred_fallthru
          _
      $region28: #{tpu_custom_call.1} parent=5 // pred_fallthru
        _
      %p199 = scmp.le.s32.totalorder 1, %s14
      %p200 = scmp.lt.s32.totalorder %s14, 3
      %p201 = pnand %p199, %p200
      %p202 = pneg %p201
      // Predicated region
      $region37: #{tpu_custom_call.1} parent=5 // pred_check
        _
      $region38: #{tpu_custom_call.1} parent=5 // pred_check_branch
        %204 = sbr.rel (%p201) target = $region40
      $region39: #{tpu_custom_call.1} parent=5 // pred_region
        %s205 = ssub.s32 %s14, 1
        %s206 = smul.u32 8, %s19
        %p207 = scmp.lt.s32.totalorder %s206, 15
        %s208 = scalar_select %p207, %s206, 15
        %s209 = smul.addr %s208, 8
        %s210 = scalar_lea.vmem %s0, %s209
        %p211 = pneg %p40
        %p212 = pneg %p37
        %p213 = scmp.lt.s32.totalorder %s19, 1
        %s214 = scalar_select %p213, %s19, 1
        %s215 = smul.addr %s214, 8
        %s216 = scalar_lea.vmem %s1, %s215
        %p217 = pneg %p66
        %p218 = pneg %p63
        %p219 = pneg %p87
        %p220 = pneg %p84
        %p221 = pneg %p108
        %p222 = pneg %p105
        %p223 = pneg %p129
        %p224 = pneg %p126
        %p225 = pneg %p155
        %p226 = pneg %p152
        %s227 = sand.u32 %s142, 1
        %s228 = scalar_lea.sflag [#allocation3], %s227
        %s229 = sand.u32 %s142, 1
        %s230 = smul.addr %s229, 8
        %s231 = scalar_lea.vmem [#allocation2], %s230
        %s232 = smul.u32 8, %s19
        %p233 = scmp.lt.s32.totalorder %s232, 15
        %s234 = scalar_select %p233, %s232, 15
        %s235 = smul.addr %s234, 8
        %s236 = scalar_lea.vmem %s0, %s235
        %s237 = smul.u32 8, %s19
        %p238 = scmp.lt.s32.totalorder %s19, 1
        %s239 = scalar_select %p238, %s19, 1
        %s240 = smul.addr %s239, 8
        %s241 = scalar_lea.vmem %s1, %s240
        %v242 = vld [vmem:[%s236] sm:$0xff]
        %v243 = vld [vmem:[%s236 + $0x8] sm:$0xff]
        %v244 = vld [vmem:[%s236 + $0x10] sm:$0xff]
        %v245 = vld [vmem:[%s236 + $0x18] sm:$0xff]
        %v246 = vld [vmem:[%s236 + $0x20] sm:$0xff]
        %v247 = vld [vmem:[%s236 + $0x28] sm:$0xff]
        %v248 = vld [vmem:[%s236 + $0x30] sm:$0xff]
        %v249 = vld [vmem:[%s236 + $0x38] sm:$0xff]
        %v250 = vld [vmem:[%s2] sm:$0xff]
        %v251 = vld [vmem:[%s2 + $0x8] sm:$0xff]
        %v252 = vld [vmem:[%s2 + $0x10] sm:$0xff]
        %v253 = vld [vmem:[%s2 + $0x18] sm:$0xff]
        %v254 = vld [vmem:[%s2 + $0x20] sm:$0xff]
        %v255 = vld [vmem:[%s2 + $0x28] sm:$0xff]
        %v256 = vld [vmem:[%s2 + $0x30] sm:$0xff]
        %v257 = vld [vmem:[%s2 + $0x38] sm:$0xff]
        %v258 = vld [vmem:[%s2 + $0x40] sm:$0xff]
        %v259 = vld [vmem:[%s2 + $0x48] sm:$0xff]
        %v260 = vld [vmem:[%s2 + $0x50] sm:$0xff]
        %v261 = vld [vmem:[%s2 + $0x58] sm:$0xff]
        %v262 = vld [vmem:[%s2 + $0x60] sm:$0xff]
        %v263 = vld [vmem:[%s2 + $0x68] sm:$0xff]
        %v264 = vld [vmem:[%s2 + $0x70] sm:$0xff]
        %v265 = vld [vmem:[%s2 + $0x78] sm:$0xff]
        %266 = vmatprep.subr.mxu0 0.0
        %267 = vmatpush1.msra.mxu0 %v250
        %268 = vmatprep.subr.mxu0 0.0
        %269 = vmatpush1.msra.mxu0 %v251
        %270 = vmatprep.subr.mxu0 0.0
        %271 = vmatpush1.msra.mxu0 %v252
        %272 = vmatprep.subr.mxu0 0.0
        %273 = vmatpush1.msra.mxu0 %v253
        %274 = vmatprep.subr.mxu0 0.0
        %275 = vmatpush1.msra.mxu0 %v254
        %276 = vmatprep.subr.mxu0 0.0
        %277 = vmatpush1.msra.mxu0 %v255
        %278 = vmatprep.subr.mxu0 0.0
        %279 = vmatpush1.msra.mxu0 %v256
        %280 = vmatprep.subr.mxu0 0.0
        %281 = vmatpush1.msra.mxu0 %v257
        %282 = vmatprep.subr.mxu0 0.0
        %283 = vmatpush1.msra.mxu0 %v258
        %284 = vmatprep.subr.mxu0 0.0
        %285 = vmatpush1.msra.mxu0 %v259
        %286 = vmatprep.subr.mxu0 0.0
        %287 = vmatpush1.msra.mxu0 %v260
        %288 = vmatprep.subr.mxu0 0.0
        %289 = vmatpush1.msra.mxu0 %v261
        %290 = vmatprep.subr.mxu0 0.0
        %291 = vmatpush1.msra.mxu0 %v262
        %292 = vmatprep.subr.mxu0 0.0
        %293 = vmatpush1.msra.mxu0 %v263
        %294 = vmatprep.subr.mxu0 0.0
        %295 = vmatpush1.msra.mxu0 %v264
        %296 = vmatprep.subr.mxu0 0.0
        %297 = vmatpush1.msra.mxu0 %v265
        %298 = vmatprep.subr.mxu0 0.0
        %299 = vmatpush1.msra.mxu0 0.0
        %300 = vmatprep.subr.mxu0 0.0
        %301 = vmatpush1.msra.mxu0 0.0
        %302 = vmatprep.subr.mxu0 0.0
        %303 = vmatpush1.msra.mxu0 0.0
        %304 = vmatprep.subr.mxu0 0.0
        %305 = vmatpush1.msra.mxu0 0.0
        %306 = vmatprep.subr.mxu0 0.0
        %307 = vmatpush1.msra.mxu0 0.0
        %308 = vmatprep.subr.mxu0 0.0
        %309 = vmatpush1.msra.mxu0 0.0
        %310 = vmatprep.subr.mxu0 0.0
        %311 = vmatpush1.msra.mxu0 0.0
        %312 = vmatprep.subr.mxu0 0.0
        %313 = vmatpush1.msra.mxu0 0.0
        %314 = vmatprep.subr.mxu0 0.0
        %315 = vmatpush1.msra.mxu0 0.0
        %316 = vmatprep.subr.mxu0 0.0
        %317 = vmatpush1.msra.mxu0 0.0
        %318 = vmatprep.subr.mxu0 0.0
        %319 = vmatpush1.msra.mxu0 0.0
        %320 = vmatprep.subr.mxu0 0.0
        %321 = vmatpush1.msra.mxu0 0.0
        %322 = vmatprep.subr.mxu0 0.0
        %323 = vmatpush1.msra.mxu0 0.0
        %324 = vmatprep.subr.mxu0 0.0
        %325 = vmatpush1.msra.mxu0 0.0
        %326 = vmatprep.subr.mxu0 0.0
        %327 = vmatpush1.msra.mxu0 0.0
        %328 = vmatprep.subr.mxu0 0.0
        %329 = vmatpush1.msra.mxu0 0.0
        %330 = vmatprep.mubr.f32.mxu0 0.0
        %331 = vmatmul.mubr.f32.gmra.mrb[0].mxu0 %v242
        %v332 = vpop.f32.mrb[0].mxu0
        %v333 = vadd.f32 0.0, %v332
        %v334 = vpop.f32.mrb[0].mxu0
        %335 = vmatprep.mubr.f32.mxu0 0.0
        %336 = vmatmul.mubr.f32.gmra.mrb[0].mxu0 %v243
        %v337 = vpop.f32.mrb[0].mxu0
        %v338 = vadd.f32 0.0, %v337
        %v339 = vpop.f32.mrb[0].mxu0
        %340 = vmatprep.mubr.f32.mxu0 0.0
        %341 = vmatmul.mubr.f32.gmra.mrb[0].mxu0 %v244
        %v342 = vpop.f32.mrb[0].mxu0
        %v343 = vadd.f32 0.0, %v342
        %v344 = vpop.f32.mrb[0].mxu0
        %345 = vmatprep.mubr.f32.mxu0 0.0
        %346 = vmatmul.mubr.f32.gmra.mrb[0].mxu0 %v245
        %v347 = vpop.f32.mrb[0].mxu0
        %v348 = vadd.f32 0.0, %v347
        %v349 = vpop.f32.mrb[0].mxu0
        %350 = vmatprep.mubr.f32.mxu0 0.0
        %351 = vmatmul.mubr.f32.gmra.mrb[0].mxu0 %v246
        %v352 = vpop.f32.mrb[0].mxu0
        %v353 = vadd.f32 0.0, %v352
        %v354 = vpop.f32.mrb[0].mxu0
        %355 = vmatprep.mubr.f32.mxu0 0.0
        %356 = vmatmul.mubr.f32.gmra.mrb[0].mxu0 %v247
        %v357 = vpop.f32.mrb[0].mxu0
        %v358 = vadd.f32 0.0, %v357
        %v359 = vpop.f32.mrb[0].mxu0
        %360 = vmatprep.mubr.f32.mxu0 0.0
        %361 = vmatmul.mubr.f32.gmra.mrb[0].mxu0 %v248
        %v362 = vpop.f32.mrb[0].mxu0
        %v363 = vadd.f32 0.0, %v362
        %v364 = vpop.f32.mrb[0].mxu0
        %365 = vmatprep.mubr.f32.mxu0 0.0
        %366 = vmatmul.mubr.f32.gmra.mrb[0].mxu0 %v249
        %v367 = vpop.f32.mrb[0].mxu0
        %v368 = vadd.f32 0.0, %v367
        %v369 = vpop.f32.mrb[0].mxu0
        %370 = vdwg.mxu0
        %v371 = vld [vmem:[%s241] sm:$0xff]
        %v372 = vld [vmem:[%s3] sm:$0xff]
        %v373 = vld [vmem:[%s3 + $0x8] sm:$0xff]
        %v374 = vld [vmem:[%s3 + $0x10] sm:$0xff]
        %v375 = vld [vmem:[%s3 + $0x18] sm:$0xff]
        %vm376 = vcmask 261120
        %v378 = vsel %vm376, %v371, 0
        %380 = vmatprep.subr.mxu0 0.0
        %381 = vmatpush1.msra.mxu0 %v372
        %382 = vmatprep.subr.mxu0 0.0
        %383 = vmatpush1.msra.mxu0 %v373
        %384 = vmatprep.subr.mxu0 0.0
        %385 = vmatpush1.msra.mxu0 %v374
        %386 = vmatprep.subr.mxu0 0.0
        %387 = vmatpush1.msra.mxu0 %v375
        %388 = vmatprep.subr.mxu0 0.0
        %389 = vmatpush1.msra.mxu0 0.0
        %390 = vmatprep.subr.mxu0 0.0
        %391 = vmatpush1.msra.mxu0 0.0
        %392 = vmatprep.subr.mxu0 0.0
        %393 = vmatpush1.msra.mxu0 0.0
        %394 = vmatprep.subr.mxu0 0.0
        %395 = vmatpush1.msra.mxu0 0.0
        %396 = vmatprep.subr.mxu0 0.0
        %397 = vmatpush1.msra.mxu0 0.0
        %398 = vmatprep.subr.mxu0 0.0
        %399 = vmatpush1.msra.mxu0 0.0
        %400 = vmatprep.subr.mxu0 0.0
        %401 = vmatpush1.msra.mxu0 0.0
        %402 = vmatprep.subr.mxu0 0.0
        %403 = vmatpush1.msra.mxu0 0.0
        %404 = vmatprep.subr.mxu0 0.0
        %405 = vmatpush1.msra.mxu0 0.0
        %406 = vmatprep.subr.mxu0 0.0
        %407 = vmatpush1.msra.mxu0 0.0
        %408 = vmatprep.subr.mxu0 0.0
        %409 = vmatpush1.msra.mxu0 0.0
        %410 = vmatprep.subr.mxu0 0.0
        %411 = vmatpush1.msra.mxu0 0.0
        %412 = vmatprep.subr.mxu0 0.0
        %413 = vmatpush1.msra.mxu0 0.0
        %414 = vmatprep.subr.mxu0 0.0
        %415 = vmatpush1.msra.mxu0 0.0
        %416 = vmatprep.subr.mxu0 0.0
        %417 = vmatpush1.msra.mxu0 0.0
        %418 = vmatprep.subr.mxu0 0.0
        %419 = vmatpush1.msra.mxu0 0.0
        %420 = vmatprep.subr.mxu0 0.0
        %421 = vmatpush1.msra.mxu0 0.0
        %422 = vmatprep.subr.mxu0 0.0
        %423 = vmatpush1.msra.mxu0 0.0
        %424 = vmatprep.subr.mxu0 0.0
        %425 = vmatpush1.msra.mxu0 0.0
        %426 = vmatprep.subr.mxu0 0.0
        %427 = vmatpush1.msra.mxu0 0.0
        %428 = vmatprep.subr.mxu0 0.0
        %429 = vmatpush1.msra.mxu0 0.0
        %430 = vmatprep.subr.mxu0 0.0
        %431 = vmatpush1.msra.mxu0 0.0
        %432 = vmatprep.subr.mxu0 0.0
        %433 = vmatpush1.msra.mxu0 0.0
        %434 = vmatprep.subr.mxu0 0.0
        %435 = vmatpush1.msra.mxu0 0.0
        %436 = vmatprep.subr.mxu0 0.0
        %437 = vmatpush1.msra.mxu0 0.0
        %438 = vmatprep.subr.mxu0 0.0
        %439 = vmatpush1.msra.mxu0 0.0
        %440 = vmatprep.subr.mxu0 0.0
        %441 = vmatpush1.msra.mxu0 0.0
        %442 = vmatprep.subr.mxu0 0.0
        %443 = vmatpush1.msra.mxu0 0.0
        %444 = vmatprep.mubr.f32.mxu0 0.0
        %445 = vmatmul.mubr.f32.gmra.mrb[0].mxu0 %v378
        %v446 = vpop.f32.mrb[0].mxu0
        %v447 = vadd.f32 0.0, %v446
        %v448 = vpop.f32.mrb[0].mxu0
        %449 = vdwg.mxu0
        %v451 = vcombine.high %v447, %v447
        %v453 = vunpack.c.l.s4 1966171168
        %v454 = vunpack.c.0.s8 %v453
        %v455 = vlaneseq
        %v456 = vshrl.u32 %v455, 7
        %v457 = vsub.s32 %v454, %v456
        %v458 = vrot.slane %v447, %v457
        %v460 = vunpack.c.l.s4 1966171168
        %v461 = vunpack.c.0.s8 %v460
        %v462 = vlaneseq
        %v463 = vshrl.u32 %v462, 7
        %v464 = vsub.s32 %v461, %v463
        %v465 = vrot.slane %v451, %v464
        %v466 = vcombine.high %v458, %v458
        %v467 = vcombine.high %v465, %v465
        %v469 = vunpack.c.l.s4 1966171168
        %v470 = vunpack.c.0.s8 %v469
        %v471 = vlaneseq
        %v472 = vshrl.u32 %v471, 7
        %v473 = vsub.s32 %v470, %v472
        %v474 = vrot.slane %v458, %v473
        %v476 = vunpack.c.l.s4 1966171168
        %v477 = vunpack.c.0.s8 %v476
        %v478 = vlaneseq
        %v479 = vshrl.u32 %v478, 7
        %v480 = vsub.s32 %v477, %v479
        %v481 = vrot.slane %v465, %v480
        %v483 = vunpack.c.l.s4 1966171168
        %v484 = vunpack.c.0.s8 %v483
        %v485 = vlaneseq
        %v486 = vshrl.u32 %v485, 7
        %v487 = vsub.s32 %v484, %v486
        %v488 = vrot.slane %v466, %v487
        %v490 = vunpack.c.l.s4 1966171168
        %v491 = vunpack.c.0.s8 %v490
        %v492 = vlaneseq
        %v493 = vshrl.u32 %v492, 7
        %v494 = vsub.s32 %v491, %v493
        %v495 = vrot.slane %v467, %v494
        %v496 = vcombine.high %v474, %v474
        %v497 = vcombine.high %v481, %v481
        %v498 = vcombine.high %v488, %v488
        %v499 = vcombine.high %v495, %v495
        %v500 = vlaneseq
        %v501 = vshrl.u32 %v500, 7
        %v502 = vsub.s32 0, %v501
        %v503 = vrot.slane %v474, %v502
        %v504 = vlaneseq
        %v505 = vshrl.u32 %v504, 7
        %v506 = vsub.s32 0, %v505
        %v507 = vrot.slane %v488, %v506
        %v508 = vlaneseq
        %v509 = vshrl.u32 %v508, 7
        %v510 = vsub.s32 0, %v509
        %v511 = vrot.slane %v496, %v510
        %v512 = vlaneseq
        %v513 = vshrl.u32 %v512, 7
        %v514 = vsub.s32 0, %v513
        %v515 = vrot.slane %v498, %v514
        %v516 = vlaneseq
        %v517 = vshrl.u32 %v516, 7
        %v518 = vsub.s32 0, %v517
        %v519 = vrot.slane %v481, %v518
        %v520 = vlaneseq
        %v521 = vshrl.u32 %v520, 7
        %v522 = vsub.s32 0, %v521
        %v523 = vrot.slane %v495, %v522
        %v524 = vlaneseq
        %v525 = vshrl.u32 %v524, 7
        %v526 = vsub.s32 0, %v525
        %v527 = vrot.slane %v497, %v526
        %v528 = vlaneseq
        %v529 = vshrl.u32 %v528, 7
        %v530 = vsub.s32 0, %v529
        %v531 = vrot.slane %v499, %v530
        %v540 = vadd.f32 %v333, %v503
        %v541 = vadd.f32 %v338, %v507
        %v542 = vadd.f32 %v343, %v511
        %v543 = vadd.f32 %v348, %v515
        %v544 = vadd.f32 %v353, %v519
        %v545 = vadd.f32 %v358, %v523
        %v546 = vadd.f32 %v363, %v527
        %v547 = vadd.f32 %v368, %v531
        %v548 = vtanh.pop %v540
        %v549 = vtanh.pop %v541
        %v550 = vtanh.pop %v542
        %v551 = vtanh.pop %v543
        %v552 = vtanh.pop %v544
        %v553 = vtanh.pop %v545
        %v554 = vtanh.pop %v546
        %v555 = vtanh.pop %v547
        %v556 = vld [vmem:[%s4] sm:$0x1]
        %v558 = vlaneseq
        %v559 = vshrl.u32 %v558, 7
        %v560 = vsub.s32 0, %v559
        %v561 = vrot.slane %v556, %v560
        %v563 = vmul.f32 %v548, %v561
        %v564 = vmul.f32 %v549, %v561
        %v565 = vmul.f32 %v550, %v561
        %v566 = vmul.f32 %v551, %v561
        %v567 = vmul.f32 %v552, %v561
        %v568 = vmul.f32 %v553, %v561
        %v569 = vmul.f32 %v554, %v561
        %v570 = vmul.f32 %v555, %v561
        %vm571 = vcmask 523264
        %v572 = vsel %vm571, %v563, 0.0
        %573 = vadd.xlane.f32.xlu0 %v572
        %v574 = vpop.xlane.xlu0 %573
        %v575 = vsel %vm571, %v564, 0.0
        %576 = vadd.xlane.f32.xlu0 %v575
        %v577 = vpop.xlane.xlu0 %576
        %v578 = vsel %vm571, %v565, 0.0
        %579 = vadd.xlane.f32.xlu0 %v578
        %v580 = vpop.xlane.xlu0 %579
        %v581 = vsel %vm571, %v566, 0.0
        %582 = vadd.xlane.f32.xlu0 %v581
        %v583 = vpop.xlane.xlu0 %582
        %v584 = vsel %vm571, %v567, 0.0
        %585 = vadd.xlane.f32.xlu0 %v584
        %v586 = vpop.xlane.xlu0 %585
        %v587 = vsel %vm571, %v568, 0.0
        %588 = vadd.xlane.f32.xlu0 %v587
        %v589 = vpop.xlane.xlu0 %588
        %v590 = vsel %vm571, %v569, 0.0
        %591 = vadd.xlane.f32.xlu0 %v590
        %v592 = vpop.xlane.xlu0 %591
        %v593 = vsel %vm571, %v570, 0.0
        %594 = vadd.xlane.f32.xlu0 %v593
        %v595 = vpop.xlane.xlu0 %594
        %v604 = vlaneseq
        %v605 = vand.u32 %v604, 127
        %v606 = vlaneseq
        %v607 = vshrl.u32 %v606, 7
        %v608 = vsub.s32 %v605, %v607
        %v609 = vrot.slane %v574, %v608
        %v610 = vlaneseq
        %v611 = vshrl.u32 %v610, 7
        %v612 = vsub.s32 %v605, %v611
        %v613 = vrot.slane %v577, %v612
        %v614 = vlaneseq
        %v615 = vshrl.u32 %v614, 7
        %v616 = vsub.s32 %v605, %v615
        %v617 = vrot.slane %v580, %v616
        %v618 = vlaneseq
        %v619 = vshrl.u32 %v618, 7
        %v620 = vsub.s32 %v605, %v619
        %v621 = vrot.slane %v583, %v620
        %v622 = vlaneseq
        %v623 = vshrl.u32 %v622, 7
        %v624 = vsub.s32 %v605, %v623
        %v625 = vrot.slane %v586, %v624
        %v626 = vlaneseq
        %v627 = vshrl.u32 %v626, 7
        %v628 = vsub.s32 %v605, %v627
        %v629 = vrot.slane %v589, %v628
        %v630 = vlaneseq
        %v631 = vshrl.u32 %v630, 7
        %v632 = vsub.s32 %v605, %v631
        %v633 = vrot.slane %v592, %v632
        %v634 = vlaneseq
        %v635 = vshrl.u32 %v634, 7
        %v636 = vsub.s32 %v605, %v635
        %v637 = vrot.slane %v595, %v636
        %vm638 = vcmask 1041409
        %v639 = vsel %vm638, %v613, %v609
        %vm640 = vcmask 1042434
        %v641 = vsel %vm640, %v617, %v639
        %vm642 = vcmask 1043459
        %v643 = vsel %vm642, %v621, %v641
        %vm644 = vcmask 1044484
        %v645 = vsel %vm644, %v625, %v643
        %vm646 = vcmask 1045509
        %v647 = vsel %vm646, %v629, %v645
        %vm648 = vcmask 1046534
        %v649 = vsel %vm648, %v633, %v647
        %vm650 = vcmask 1047559
        %v651 = vsel %vm650, %v637, %v649
        %vm653 = vcmask 64512
        %v654 = vsel %vm653, %v651, -inf
        %655 = vmax.xlane.f32.xlu0 %v654
        %v656 = vpop.xlane.xlu0 %655
        %v658 = vlaneseq
        %v659 = vshrl.u32 %v658, 7
        %v660 = vsub.s32 0, %v659
        %v661 = vrot.slane %v656, %v660
        %v662 = vlaneseq
        %v663 = vshrl.u32 %v662, 7
        %v664 = vsub.s32 1, %v663
        %v665 = vrot.slane %v656, %v664
        %v666 = vlaneseq
        %v667 = vshrl.u32 %v666, 7
        %v668 = vsub.s32 2, %v667
        %v669 = vrot.slane %v656, %v668
        %v670 = vlaneseq
        %v671 = vshrl.u32 %v670, 7
        %v672 = vsub.s32 3, %v671
        %v673 = vrot.slane %v656, %v672
        %v674 = vlaneseq
        %v675 = vshrl.u32 %v674, 7
        %v676 = vsub.s32 4, %v675
        %v677 = vrot.slane %v656, %v676
        %v678 = vlaneseq
        %v679 = vshrl.u32 %v678, 7
        %v680 = vsub.s32 5, %v679
        %v681 = vrot.slane %v656, %v680
        %v682 = vlaneseq
        %v683 = vshrl.u32 %v682, 7
        %v684 = vsub.s32 6, %v683
        %v685 = vrot.slane %v656, %v684
        %v686 = vlaneseq
        %v687 = vshrl.u32 %v686, 7
        %v688 = vsub.s32 7, %v687
        %v689 = vrot.slane %v656, %v688
        %v698 = vsub.f32 %v574, %v661
        %v699 = vsub.f32 %v577, %v665
        %v700 = vsub.f32 %v580, %v669
        %v701 = vsub.f32 %v583, %v673
        %v702 = vsub.f32 %v586, %v677
        %v703 = vsub.f32 %v589, %v681
        %v704 = vsub.f32 %v592, %v685
        %v705 = vsub.f32 %v595, %v689
        %v706 = vmul.f32 %v698, 1.442695
        %v707 = vpow.pop %v706
        %v708 = vmul.f32 %v699, 1.442695
        %v709 = vpow.pop %v708
        %v710 = vmul.f32 %v700, 1.442695
        %v711 = vpow.pop %v710
        %v712 = vmul.f32 %v701, 1.442695
        %v713 = vpow.pop %v712
        %v714 = vmul.f32 %v702, 1.442695
        %v715 = vpow.pop %v714
        %v716 = vmul.f32 %v703, 1.442695
        %v717 = vpow.pop %v716
        %v718 = vmul.f32 %v704, 1.442695
        %v719 = vpow.pop %v718
        %v720 = vmul.f32 %v705, 1.442695
        %v721 = vpow.pop %v720
        %730 = vset.pattern.permute.xlu0 0
        %731 = vperm.xlu0 %730, %v707
        %v732 = vpop.permute.xlu0 %731
        %733 = vset.pattern.permute.xlu0 0
        %734 = vperm.xlu0 %733, %v709
        %v735 = vpop.permute.xlu0 %734
        %736 = vset.pattern.permute.xlu0 0
        %737 = vperm.xlu0 %736, %v711
        %v738 = vpop.permute.xlu0 %737
        %739 = vset.pattern.permute.xlu0 0
        %740 = vperm.xlu0 %739, %v713
        %v741 = vpop.permute.xlu0 %740
        %742 = vset.pattern.permute.xlu0 0
        %743 = vperm.xlu0 %742, %v715
        %v744 = vpop.permute.xlu0 %743
        %745 = vset.pattern.permute.xlu0 0
        %746 = vperm.xlu0 %745, %v717
        %v747 = vpop.permute.xlu0 %746
        %748 = vset.pattern.permute.xlu0 0
        %749 = vperm.xlu0 %748, %v719
        %v750 = vpop.permute.xlu0 %749
        %751 = vset.pattern.permute.xlu0 0
        %752 = vperm.xlu0 %751, %v721
        %v753 = vpop.permute.xlu0 %752
        %v754 = vlaneseq
        %v755 = vshrl.u32 %v754, 7
        %v756 = vsub.s32 %v605, %v755
        %v757 = vrot.slane %v732, %v756
        %v758 = vlaneseq
        %v759 = vshrl.u32 %v758, 7
        %v760 = vsub.s32 %v605, %v759
        %v761 = vrot.slane %v735, %v760
        %v762 = vlaneseq
        %v763 = vshrl.u32 %v762, 7
        %v764 = vsub.s32 %v605, %v763
        %v765 = vrot.slane %v738, %v764
        %v766 = vlaneseq
        %v767 = vshrl.u32 %v766, 7
        %v768 = vsub.s32 %v605, %v767
        %v769 = vrot.slane %v741, %v768
        %v770 = vlaneseq
        %v771 = vshrl.u32 %v770, 7
        %v772 = vsub.s32 %v605, %v771
        %v773 = vrot.slane %v744, %v772
        %v774 = vlaneseq
        %v775 = vshrl.u32 %v774, 7
        %v776 = vsub.s32 %v605, %v775
        %v777 = vrot.slane %v747, %v776
        %v778 = vlaneseq
        %v779 = vshrl.u32 %v778, 7
        %v780 = vsub.s32 %v605, %v779
        %v781 = vrot.slane %v750, %v780
        %v782 = vlaneseq
        %v783 = vshrl.u32 %v782, 7
        %v784 = vsub.s32 %v605, %v783
        %v785 = vrot.slane %v753, %v784
        %v786 = vsel %vm638, %v761, %v757
        %v787 = vsel %vm640, %v765, %v786
        %v788 = vsel %vm642, %v769, %v787
        %v789 = vsel %vm644, %v773, %v788
        %v790 = vsel %vm646, %v777, %v789
        %v791 = vsel %vm648, %v781, %v790
        %v792 = vsel %vm650, %v785, %v791
        %v794 = vsel %vm653, %v792, 0.0
        %795 = vadd.xlane.f32.xlu0 %v794
        %v796 = vpop.xlane.xlu0 %795
        %v797 = vrcp.pop %v796
        %v799 = vlaneseq
        %v800 = vshrl.u32 %v799, 7
        %v801 = vsub.s32 0, %v800
        %v802 = vrot.slane %v797, %v801
        %v803 = vlaneseq
        %v804 = vshrl.u32 %v803, 7
        %v805 = vsub.s32 1, %v804
        %v806 = vrot.slane %v797, %v805
        %v807 = vlaneseq
        %v808 = vshrl.u32 %v807, 7
        %v809 = vsub.s32 2, %v808
        %v810 = vrot.slane %v797, %v809
        %v811 = vlaneseq
        %v812 = vshrl.u32 %v811, 7
        %v813 = vsub.s32 3, %v812
        %v814 = vrot.slane %v797, %v813
        %v815 = vlaneseq
        %v816 = vshrl.u32 %v815, 7
        %v817 = vsub.s32 4, %v816
        %v818 = vrot.slane %v797, %v817
        %v819 = vlaneseq
        %v820 = vshrl.u32 %v819, 7
        %v821 = vsub.s32 5, %v820
        %v822 = vrot.slane %v797, %v821
        %v823 = vlaneseq
        %v824 = vshrl.u32 %v823, 7
        %v825 = vsub.s32 6, %v824
        %v826 = vrot.slane %v797, %v825
        %v827 = vlaneseq
        %v828 = vshrl.u32 %v827, 7
        %v829 = vsub.s32 7, %v828
        %v830 = vrot.slane %v797, %v829
        %v839 = vmul.f32 %v707, %v802
        %v840 = vmul.f32 %v709, %v806
        %v841 = vmul.f32 %v711, %v810
        %v842 = vmul.f32 %v713, %v814
        %v843 = vmul.f32 %v715, %v818
        %v844 = vmul.f32 %v717, %v822
        %v845 = vmul.f32 %v719, %v826
        %v846 = vmul.f32 %v721, %v830
        %848 = vset.pattern.permute.xlu0 0
        %849 = vperm.xlu0 %848, %v839
        %v850 = vpop.permute.xlu0 %849
        %853 = vset.pattern.permute.xlu0 0
        %854 = vperm.xlu0 %853, %v840
        %v855 = vpop.permute.xlu0 %854
        %858 = vset.pattern.permute.xlu0 0
        %859 = vperm.xlu0 %858, %v841
        %v860 = vpop.permute.xlu0 %859
        %863 = vset.pattern.permute.xlu0 0
        %864 = vperm.xlu0 %863, %v842
        %v865 = vpop.permute.xlu0 %864
        %868 = vset.pattern.permute.xlu0 0
        %869 = vperm.xlu0 %868, %v843
        %v870 = vpop.permute.xlu0 %869
        %873 = vset.pattern.permute.xlu0 0
        %874 = vperm.xlu0 %873, %v844
        %v875 = vpop.permute.xlu0 %874
        %878 = vset.pattern.permute.xlu0 0
        %879 = vperm.xlu0 %878, %v845
        %v880 = vpop.permute.xlu0 %879
        %883 = vset.pattern.permute.xlu0 0
        %884 = vperm.xlu0 %883, %v846
        %v885 = vpop.permute.xlu0 %884
        %v887 = vmul.f32 %v850, %v242
        %v888 = vmul.f32 %v855, %v243
        %v889 = vmul.f32 %v860, %v244
        %v890 = vmul.f32 %v865, %v245
        %v891 = vmul.f32 %v870, %v246
        %v892 = vmul.f32 %v875, %v247
        %v893 = vmul.f32 %v880, %v248
        %v894 = vmul.f32 %v885, %v249
        %v895 = vrot.slane %v887, 4
        %v896 = vadd.f32 %v887, %v895
        %v897 = vrot.slane %v896, 2
        %v898 = vadd.f32 %v896, %v897
        %v899 = vrot.slane %v898, 1
        %v900 = vadd.f32 %v898, %v899
        %v901 = vrot.slane %v888, 4
        %v902 = vadd.f32 %v888, %v901
        %v903 = vrot.slane %v902, 2
        %v904 = vadd.f32 %v902, %v903
        %v905 = vrot.slane %v904, 1
        %v906 = vadd.f32 %v904, %v905
        %v907 = vrot.slane %v889, 4
        %v908 = vadd.f32 %v889, %v907
        %v909 = vrot.slane %v908, 2
        %v910 = vadd.f32 %v908, %v909
        %v911 = vrot.slane %v910, 1
        %v912 = vadd.f32 %v910, %v911
        %v913 = vrot.slane %v890, 4
        %v914 = vadd.f32 %v890, %v913
        %v915 = vrot.slane %v914, 2
        %v916 = vadd.f32 %v914, %v915
        %v917 = vrot.slane %v916, 1
        %v918 = vadd.f32 %v916, %v917
        %v919 = vrot.slane %v891, 4
        %v920 = vadd.f32 %v891, %v919
        %v921 = vrot.slane %v920, 2
        %v922 = vadd.f32 %v920, %v921
        %v923 = vrot.slane %v922, 1
        %v924 = vadd.f32 %v922, %v923
        %v925 = vrot.slane %v892, 4
        %v926 = vadd.f32 %v892, %v925
        %v927 = vrot.slane %v926, 2
        %v928 = vadd.f32 %v926, %v927
        %v929 = vrot.slane %v928, 1
        %v930 = vadd.f32 %v928, %v929
        %v931 = vrot.slane %v893, 4
        %v932 = vadd.f32 %v893, %v931
        %v933 = vrot.slane %v932, 2
        %v934 = vadd.f32 %v932, %v933
        %v935 = vrot.slane %v934, 1
        %v936 = vadd.f32 %v934, %v935
        %v937 = vrot.slane %v894, 4
        %v938 = vadd.f32 %v894, %v937
        %v939 = vrot.slane %v938, 2
        %v940 = vadd.f32 %v938, %v939
        %v941 = vrot.slane %v940, 1
        %v942 = vadd.f32 %v940, %v941
        %v943 = vadd.f32 %v900, 0.0
        %v944 = vadd.f32 %v906, 0.0
        %v945 = vadd.f32 %v912, 0.0
        %v946 = vadd.f32 %v918, 0.0
        %v947 = vadd.f32 %v924, 0.0
        %v948 = vadd.f32 %v930, 0.0
        %v949 = vadd.f32 %v936, 0.0
        %v950 = vadd.f32 %v942, 0.0
        %v959 = vsel %vm638, %v944, %v943
        %v960 = vsel %vm640, %v945, %v959
        %v961 = vsel %vm642, %v946, %v960
        %v962 = vsel %vm644, %v947, %v961
        %v963 = vsel %vm646, %v948, %v962
        %v964 = vsel %vm648, %v949, %v963
        %v965 = vsel %vm650, %v950, %v964
        %967 = vst [vmem:[%s231] sm:$0xff] %v965
        %s968 = sand.u32 %s142, 1
        %s969 = scalar_lea.sflag [#allocation3], %s968
        %s970 = sand.u32 %s142, 1
        %s971 = smul.addr %s970, 8
        %s972 = scalar_lea.vmem [#allocation2], %s971
        // Predicated region
        $region41: #{tpu_custom_call.1} parent=39 // pred_check
          %p973 = pneg %p152
        $region42: #{tpu_custom_call.1} parent=39 // pred_check_branch
          %975 = sbr.rel (%p973) target = $region44
        $region43: #{tpu_custom_call.1} parent=39 // pred_region
          %s977 = ssub.s32 128, 128
          %978 = vsyncadd %s969, %s977
          %s979 = smul.addr %s19, 128
          %s980 = scalar_lea.hbm %s5, %s979
          %s982 = sshll.u32 %s972, 4
          %s983 = int_to_ptr.vmem [resolvable:$true] %s982
          %985 = dma.vmem_to_hbm [thread:$0]  %s983, 128, %s980, %s969
        $region44: #{tpu_custom_call.1} parent=39 // pred_fallthru
          _
      $region40: #{tpu_custom_call.1} parent=5 // pred_fallthru
        _
      %p986 = scmp.le.s32.totalorder 2, %s14
      // Predicated region
      $region45: #{tpu_custom_call.1} parent=5 // pred_check
        %p987 = pneg %p986
      $region46: #{tpu_custom_call.1} parent=5 // pred_check_branch
        %989 = sbr.rel (%p987) target = $region48
      $region47: #{tpu_custom_call.1} parent=5 // pred_region
        %s990 = ssub.s32 %s14, 2
        // Predicated region
        $region49: #{tpu_custom_call.1} parent=47 // pred_check
          %p991 = pneg %p158
        $region50: #{tpu_custom_call.1} parent=47 // pred_check_branch
          %993 = sbr.rel (%p991) target = $region52
        $region51: #{tpu_custom_call.1} parent=47 // pred_region
          %s994 = sand.u32 %s143, 1
          %s995 = scalar_lea.sflag [#allocation3], %s994
          %s996 = sand.u32 %s143, 1
          %s997 = smul.addr %s996, 8
          %s998 = scalar_lea.vmem [#allocation2], %s997
          %999 = dma.done %s995, 128
        $region52: #{tpu_custom_call.1} parent=47 // pred_fallthru
          _
      $region48: #{tpu_custom_call.1} parent=5 // pred_fallthru
        _
    $region6: #{tpu_custom_call.1} parent=1 // loop_footer
      %s18 = sadd.s32 1, %s14
    $region7: #{tpu_custom_call.1} parent=1 // loop_footer_branch
      %13 = sbr.rel target = $region3
    $region8: #{tpu_custom_call.1} parent=1 // loop_exit
      _
    %1000 = vsyncpa [#allocation3], 1
    %s1001 = scalar_lea.sflag [#allocation3], 1
    %1002 = vsyncpa %s1001, 1

</llo_original>
